<compile_context>
chip_gen: v7x
topology: tpu7x:2x2x1
jax: 0.10.0
libtpu: 0.0.40
codegen_flags: <defaults>
</compile_context>

<pallas_src>
import functools

import jax
import jax.numpy as jnp
from jax.experimental import pallas as pl
from jax.experimental.pallas import tpu as pltpu

LANE = 128          # vreg lane width
_MIB = 1 << 20


def _cdiv(a, b):
    return (a + b - 1) // b


def _round_up(a, b):
    return _cdiv(a, b) * b


def _mlp_kernel(num_layers, compute_dtype, x_ref, *refs):
    """refs = (w0, b0, w1, b1, ..., w_{L-1}, b_{L-1}, out_ref)."""
    out_ref = refs[-1]
    h = x_ref[...]  # native dtype -> MXU runs bf16-native when inputs are bf16
    for i in range(num_layers):
        w = refs[2 * i][...]
        b = refs[2 * i + 1][...]
        acc = jnp.dot(h, w, preferred_element_type=jnp.float32)
        acc = acc + b.astype(jnp.float32)
        if i < num_layers - 1:
            acc = jnp.maximum(acc, 0.0)              # F.relu
            h = acc.astype(compute_dtype)            # back to native for MXU
        else:
            out_ref[...] = acc.astype(out_ref.dtype)


def _param_spec(shape, single_buffer):
    """Constant-index BlockSpec for a resident weight / bias tile.

    The block index never changes across grid steps, so the buffer is DMA'd
    once and reused.  With single_buffer=True we additionally request
    Buffered(1): double-buffering a never-changing block only wastes VMEM
    (matters on v7x's 64 MiB VMEM once hidden dims grow, zero throughput
    cost otherwise).
    """
    idx_map = lambda i: (0, 0)
    if single_buffer and hasattr(pl, "Buffered"):
        try:
            return pl.BlockSpec(shape, idx_map, pipeline_mode=pl.Buffered(1))
        except TypeError:        # older BlockSpec without pipeline_mode kwarg
            pass
    return pl.BlockSpec(shape, idx_map)


def mlp_forward(x, weights, biases, *, row_tile=512, vmem_limit_bytes=None):
    """Run the fused MLP kernel.

    x:        [..., input_dim]
    weights:  list of [in_i, out_i] arrays
    biases:   list of [1, out_i] arrays
    row_tile: max rows per grid step.  Sweep 512-1024 on all generations
              (v5e included); the wrapper auto-caps it for small M, for the
              v7x two-TensorCore split, and for the f32-intermediate budget.
    """
    num_layers = len(weights)
    assert num_layers == len(biases) and num_layers >= 1
    lead_shape = x.shape[:-1]
    in_dim = x.shape[-1]
    out_dim = weights[-1].shape[-1]
    dtype = x.dtype
    itemsize = jnp.dtype(dtype).itemsize

    # Sublane granularity for the row dimension of a block.
    min_rows = 16 if dtype == jnp.bfloat16 else 8

    x2d = x.reshape(-1, in_dim)
    m = x2d.shape[0]

    # ---- Lane-dense output: pad the last layer so the output width is a
    # multiple of 128 lanes (out_dim=4 would otherwise force masked partial
    # stores every 8 rows).  Padded columns get weight/bias 0 and are sliced
    # off after the call, before the reshape.
    n_pad = _round_up(out_dim, LANE)
    weights = list(weights)
    biases = list(biases)
    if n_pad != out_dim:
        weights[-1] = jnp.pad(weights[-1], ((0, 0), (0, n_pad - out_dim)))
        biases[-1] = jnp.pad(biases[-1], ((0, 0), (0, n_pad - out_dim)))

    # ---- Row-tile selection.
    #  * acc_cap: keep the widest f32 intermediate (tile x max_n) around 4 MiB
    #    so large hidden dims don't flip the kernel into a spill/VMEM-bound
    #    regime (worst on v7x's 64 MiB VMEM).
    #  * two_core_cap: tile <= ceil(M/2) so the grid has >= 2 steps and the
    #    "parallel" row axis can shard across v7x's two TensorCores.
    #  * Ragged M: cdiv grid + Pallas edge blocks (rows are independent, OOB
    #    writes are dropped) -- no jnp.pad copy of x in HBM.
    max_n = max(w.shape[1] for w in weights)
    acc_budget = 4 * _MIB
    acc_cap = max(min_rows, (acc_budget // (max_n * 4)) // min_rows * min_rows)
    row_tile = max(min_rows, _round_up(row_tile, min_rows))
    two_core_cap = _round_up(_cdiv(m, 2), min_rows)
    tile = max(min_rows, min(row_tile, acc_cap, two_core_cap))

    grid = (_cdiv(m, tile),)

    params = []
    for w, b in zip(weights, biases):
        params.extend([w, b])

    # ---- Explicit VMEM budget from the actual resident footprint:
    # double-buffered x/out tiles + (conservatively double-buffered) resident
    # weights/biases + per-layer f32 intermediate (+ compute-dtype copy), with
    # 2x headroom.  Never below the 32 MiB scoped default.
    if vmem_limit_bytes is None:
        x_buf = 2 * tile * in_dim * itemsize
        out_buf = 2 * tile * n_pad * itemsize
        param_buf = 2 * sum(int(p.size) * p.dtype.itemsize for p in params)
        interm_buf = 2 * tile * max_n * (4 + itemsize)
        footprint = x_buf + out_buf + param_buf + interm_buf
        vmem_limit_bytes = int(min(max(32 * _MIB, 2 * footprint), 100 * _MIB))

    kernel = functools.partial(_mlp_kernel, num_layers, dtype)
    out_shape = jax.ShapeDtypeStruct((m, n_pad), dtype)

    def build(single_buffer_weights):
        in_specs = [pl.BlockSpec((tile, in_dim), lambda i: (i, 0))]
        for w, b in zip(weights, biases):
            in_specs.append(_param_spec(w.shape, single_buffer_weights))
            in_specs.append(_param_spec(b.shape, single_buffer_weights))
        out_specs = pl.BlockSpec((tile, n_pad), lambda i: (i, 0))
        return pl.pallas_call(
            kernel,
            out_shape=out_shape,
            grid_spec=pltpu.PrefetchScalarGridSpec(
                num_scalar_prefetch=0,
                grid=grid,
                in_specs=in_specs,
                out_specs=out_specs,
            ),
            compiler_params=pltpu.CompilerParams(
                dimension_semantics=("parallel",),
                vmem_limit_bytes=vmem_limit_bytes,
            ),
        )

    try:
        out2d = build(single_buffer_weights=True)(x2d, *params)
    except Exception:
        # pipeline_mode=pl.Buffered(1) not supported on this jax/backend:
        # fall back to default double-buffered resident weights (correctness
        # identical, slightly larger VMEM footprint).
        out2d = build(single_buffer_weights=False)(x2d, *params)

    # Drop the lane padding BEFORE reshaping back to the leading dims.
    out2d = out2d[:, :out_dim]
    return out2d.reshape(*lead_shape, out_dim)


def init_mlp_params(key, input_dim, hidden_dim, output_dim, num_layers,
                    dtype=jnp.float32):
    """Deterministic synthetic init matching nn.Linear shapes.

    PyTorch nn.Linear(n, k) has weight [k, n]; we store its transpose [n, k].
    """
    h = [hidden_dim] * (num_layers - 1)
    dims_in = [input_dim] + h
    dims_out = h + [output_dim]
    weights, biases = [], []
    for n, k in zip(dims_in, dims_out):
        key, wk, bk = jax.random.split(key, 3)
        bound = 1.0 / (n ** 0.5)  # same scale family as nn.Linear default
        w = jax.random.uniform(wk, (n, k), dtype, minval=-bound, maxval=bound)
        b = jax.random.uniform(bk, (1, k), dtype, minval=-bound, maxval=bound)
        weights.append(w)
        biases.append(b)
    return weights, biases


def mlp_reference(x, weights, biases):
    """Plain-JAX reference replicating the PyTorch forward."""
    num_layers = len(weights)
    h = x
    for i, (w, b) in enumerate(zip(weights, biases)):
        h = h @ w + b[0]
        if i < num_layers - 1:
            h = jax.nn.relu(h)
    return h


if __name__ == "__main__":
    # Small DETR-like shapes: batch=2, input_dim=32, hidden_dim=32,
    # output_dim=4 (bbox head), num_layers=3.
    # NOTE: f32 tolerances below; for bf16 inputs use bf16-appropriate
    # tolerances (per-layer f32->bf16 casts introduce ~1% rounding).
    input_dim, hidden_dim, output_dim, num_layers = 32, 32, 4, 3

    key = jax.random.PRNGKey(0)
    weights, biases = init_mlp_params(
        key, input_dim, hidden_dim, output_dim, num_layers)

    # Case 1: tiny (M=16) -> tile auto-shrunk to 8, grid=(2,) so both v7x
    # TensorCores stay busy even at toy sizes.
    key, xk1 = jax.random.split(key)
    x_small = jax.random.normal(xk1, (2, 8, input_dim), dtype=jnp.float32)
    out_small = jax.block_until_ready(mlp_forward(x_small, weights, biases))
    ref_small = mlp_reference(x_small, weights, biases)
    assert out_small.shape == (2, 8, output_dim)
    assert jnp.allclose(out_small, ref_small, atol=1e-5, rtol=1e-5), \
        "small-case mismatch vs reference"

    # Case 2: ragged row count (M = 2*100 = 200) -> tile=104, grid=(2,); the
    # second block is a Pallas edge block (no jnp.pad copy of x) and the
    # lane-dense (N=4 -> 128) output path + post-slice is exercised.
    key, xk2 = jax.random.split(key)
    x_ragged = jax.random.normal(xk2, (2, 100, input_dim), dtype=jnp.float32)
    out_ragged = jax.block_until_ready(
        mlp_forward(x_ragged, weights, biases, row_tile=128))
    ref_ragged = mlp_reference(x_ragged, weights, biases)
    assert out_ragged.shape == (2, 100, output_dim)
    assert jnp.allclose(out_ragged, ref_ragged, atol=1e-5, rtol=1e-5), \
        "ragged-case mismatch vs reference"

    print("KERNEL_OK")
</pallas_src>

<mosaic_0001>
module attributes {stable_mosaic.version = 11 : i64} {
  func.func @_mlp_kernel(%arg0: i32, %arg1: memref<8x32xf32, #tpu.memory_space<vmem>>, %arg2: memref<32x32xf32, #tpu.memory_space<vmem>>, %arg3: memref<1x32xf32, #tpu.memory_space<vmem>>, %arg4: memref<32x32xf32, #tpu.memory_space<vmem>>, %arg5: memref<1x32xf32, #tpu.memory_space<vmem>>, %arg6: memref<32x128xf32, #tpu.memory_space<vmem>>, %arg7: memref<1x128xf32, #tpu.memory_space<vmem>>, %arg8: memref<8x128xf32, #tpu.memory_space<vmem>>) attributes {dimension_semantics = [#tpu.dimension_semantics<parallel>], iteration_bounds = array<i64: 2>, scalar_prefetch = 0 : i64, scratch_operands = 0 : i64, tpu.core_type = #tpu.core_type<tc>, window_params = [{transform_indices = @transform_0, window_bounds = array<i64: 8, 32>}, {pipeline_mode = #tpu.pipeline_mode<synchronous>, transform_indices = @transform_1, window_bounds = array<i64: 32, 32>}, {pipeline_mode = #tpu.pipeline_mode<synchronous>, transform_indices = @transform_2, window_bounds = array<i64: 1, 32>}, {pipeline_mode = #tpu.pipeline_mode<synchronous>, transform_indices = @transform_3, window_bounds = array<i64: 32, 32>}, {pipeline_mode = #tpu.pipeline_mode<synchronous>, transform_indices = @transform_4, window_bounds = array<i64: 1, 32>}, {pipeline_mode = #tpu.pipeline_mode<synchronous>, transform_indices = @transform_5, window_bounds = array<i64: 32, 128>}, {pipeline_mode = #tpu.pipeline_mode<synchronous>, transform_indices = @transform_6, window_bounds = array<i64: 1, 128>}, {transform_indices = @transform_7, window_bounds = array<i64: 8, 128>}]} {
    %c0 = arith.constant 0 : index
    %c0_0 = arith.constant 0 : index
    %0 = vector.load %arg1[%c0, %c0_0] : memref<8x32xf32, #tpu.memory_space<vmem>>, vector<8x32xf32>
    %c0_1 = arith.constant 0 : index
    %c0_2 = arith.constant 0 : index
    %1 = vector.load %arg2[%c0_1, %c0_2] : memref<32x32xf32, #tpu.memory_space<vmem>>, vector<32x32xf32>
    %c0_3 = arith.constant 0 : index
    %c0_4 = arith.constant 0 : index
    %2 = vector.load %arg3[%c0_3, %c0_4] : memref<1x32xf32, #tpu.memory_space<vmem>>, vector<1x32xf32>
    %cst = arith.constant dense<0.000000e+00> : vector<8x32xf32>
    %3 = tpu.matmul %0, %1, %cst {dimension_numbers = #tpu.dot_dimension_numbers<[1], [0], [0], [1], [0, 0, 1, 1], [], []>} : vector<8x32xf32>, vector<32x32xf32>, vector<8x32xf32> -> vector<8x32xf32>
    %4 = vector.broadcast %2 : vector<1x32xf32> to vector<8x32xf32>
    %5 = arith.addf %3, %4 : vector<8x32xf32>
    %cst_5 = arith.constant 0.000000e+00 : f32
    %6 = vector.broadcast %cst_5 : f32 to vector<8x32xf32>
    %7 = arith.maximumf %5, %6 : vector<8x32xf32>
    %c0_6 = arith.constant 0 : index
    %c0_7 = arith.constant 0 : index
    %8 = vector.load %arg4[%c0_6, %c0_7] : memref<32x32xf32, #tpu.memory_space<vmem>>, vector<32x32xf32>
    %c0_8 = arith.constant 0 : index
    %c0_9 = arith.constant 0 : index
    %9 = vector.load %arg5[%c0_8, %c0_9] : memref<1x32xf32, #tpu.memory_space<vmem>>, vector<1x32xf32>
    %cst_10 = arith.constant dense<0.000000e+00> : vector<8x32xf32>
    %10 = tpu.matmul %7, %8, %cst_10 {dimension_numbers = #tpu.dot_dimension_numbers<[1], [0], [0], [1], [0, 0, 1, 1], [], []>} : vector<8x32xf32>, vector<32x32xf32>, vector<8x32xf32> -> vector<8x32xf32>
    %11 = vector.broadcast %9 : vector<1x32xf32> to vector<8x32xf32>
    %12 = arith.addf %10, %11 : vector<8x32xf32>
    %cst_11 = arith.constant 0.000000e+00 : f32
    %13 = vector.broadcast %cst_11 : f32 to vector<8x32xf32>
    %14 = arith.maximumf %12, %13 : vector<8x32xf32>
    %c0_12 = arith.constant 0 : index
    %c0_13 = arith.constant 0 : index
    %15 = vector.load %arg6[%c0_12, %c0_13] : memref<32x128xf32, #tpu.memory_space<vmem>>, vector<32x128xf32>
    %c0_14 = arith.constant 0 : index
    %c0_15 = arith.constant 0 : index
    %16 = vector.load %arg7[%c0_14, %c0_15] : memref<1x128xf32, #tpu.memory_space<vmem>>, vector<1x128xf32>
    %cst_16 = arith.constant dense<0.000000e+00> : vector<8x128xf32>
    %17 = tpu.matmul %14, %15, %cst_16 {dimension_numbers = #tpu.dot_dimension_numbers<[1], [0], [0], [1], [0, 0, 1, 1], [], []>} : vector<8x32xf32>, vector<32x128xf32>, vector<8x128xf32> -> vector<8x128xf32>
    %18 = vector.broadcast %16 : vector<1x128xf32> to vector<8x128xf32>
    %19 = arith.addf %17, %18 : vector<8x128xf32>
    %c0_17 = arith.constant 0 : index
    %c0_18 = arith.constant 0 : index
    %20 = vector.load %arg8[%c0_17, %c0_18] : memref<8x128xf32, #tpu.memory_space<vmem>>, vector<8x128xf32>
    tpu.vector_store %arg8[%c0_17, %c0_18], %19 {strides = array<i32>} : memref<8x128xf32, #tpu.memory_space<vmem>>, vector<8x128xf32>,
    return
  }
  func.func @transform_0(%arg0: i32) -> (i32, i32) {
    %c0_i32 = arith.constant 0 : i32
    %c0_i32_0 = arith.constant 0 : i32
    return %arg0, %c0_i32 : i32, i32
  }
  func.func @transform_1(%arg0: i32) -> (i32, i32) {
    %c0_i32 = arith.constant 0 : i32
    %c0_i32_0 = arith.constant 0 : i32
    %c0_i32_1 = arith.constant 0 : i32
    return %c0_i32, %c0_i32_0 : i32, i32
  }
  func.func @transform_2(%arg0: i32) -> (i32, i32) {
    %c0_i32 = arith.constant 0 : i32
    %c0_i32_0 = arith.constant 0 : i32
    %c0_i32_1 = arith.constant 0 : i32
    return %c0_i32, %c0_i32_0 : i32, i32
  }
  func.func @transform_3(%arg0: i32) -> (i32, i32) {
    %c0_i32 = arith.constant 0 : i32
    %c0_i32_0 = arith.constant 0 : i32
    %c0_i32_1 = arith.constant 0 : i32
    return %c0_i32, %c0_i32_0 : i32, i32
  }
  func.func @transform_4(%arg0: i32) -> (i32, i32) {
    %c0_i32 = arith.constant 0 : i32
    %c0_i32_0 = arith.constant 0 : i32
    %c0_i32_1 = arith.constant 0 : i32
    return %c0_i32, %c0_i32_0 : i32, i32
  }
  func.func @transform_5(%arg0: i32) -> (i32, i32) {
    %c0_i32 = arith.constant 0 : i32
    %c0_i32_0 = arith.constant 0 : i32
    %c0_i32_1 = arith.constant 0 : i32
    return %c0_i32, %c0_i32_0 : i32, i32
  }
  func.func @transform_6(%arg0: i32) -> (i32, i32) {
    %c0_i32 = arith.constant 0 : i32
    %c0_i32_0 = arith.constant 0 : i32
    %c0_i32_1 = arith.constant 0 : i32
    return %c0_i32, %c0_i32_0 : i32, i32
  }
  func.func @transform_7(%arg0: i32) -> (i32, i32) {
    %c0_i32 = arith.constant 0 : i32
    %c0_i32_0 = arith.constant 0 : i32
    return %arg0, %c0_i32 : i32, i32
  }
}

module attributes {stable_mosaic.version = 11 : i64} {
  func.func @_mlp_kernel(%arg0: i32, %arg1: memref<8x32xf32, #tpu.memory_space<vmem>>, %arg2: memref<32x32xf32, #tpu.memory_space<vmem>>, %arg3: memref<1x32xf32, #tpu.memory_space<vmem>>, %arg4: memref<32x32xf32, #tpu.memory_space<vmem>>, %arg5: memref<1x32xf32, #tpu.memory_space<vmem>>, %arg6: memref<32x128xf32, #tpu.memory_space<vmem>>, %arg7: memref<1x128xf32, #tpu.memory_space<vmem>>, %arg8: memref<8x128xf32, #tpu.memory_space<vmem>>) attributes {dimension_semantics = [#tpu.dimension_semantics<parallel>], iteration_bounds = array<i64: 2>, scalar_prefetch = 0 : i64, scratch_operands = 0 : i64, tpu.core_type = #tpu.core_type<tc>, window_params = [{transform_indices = @transform_0, window_bounds = array<i64: 8, 32>}, {pipeline_mode = #tpu.pipeline_mode<synchronous>, transform_indices = @transform_1, window_bounds = array<i64: 32, 32>}, {pipeline_mode = #tpu.pipeline_mode<synchronous>, transform_indices = @transform_2, window_bounds = array<i64: 1, 32>}, {pipeline_mode = #tpu.pipeline_mode<synchronous>, transform_indices = @transform_3, window_bounds = array<i64: 32, 32>}, {pipeline_mode = #tpu.pipeline_mode<synchronous>, transform_indices = @transform_4, window_bounds = array<i64: 1, 32>}, {pipeline_mode = #tpu.pipeline_mode<synchronous>, transform_indices = @transform_5, window_bounds = array<i64: 32, 128>}, {pipeline_mode = #tpu.pipeline_mode<synchronous>, transform_indices = @transform_6, window_bounds = array<i64: 1, 128>}, {transform_indices = @transform_7, window_bounds = array<i64: 8, 128>}]} {
    %c0 = arith.constant 0 : index
    %c0_0 = arith.constant 0 : index
    %0 = vector.load %arg1[%c0, %c0_0] : memref<8x32xf32, #tpu.memory_space<vmem>>, vector<8x32xf32>
    %c0_1 = arith.constant 0 : index
    %c0_2 = arith.constant 0 : index
    %1 = vector.load %arg2[%c0_1, %c0_2] : memref<32x32xf32, #tpu.memory_space<vmem>>, vector<32x32xf32>
    %c0_3 = arith.constant 0 : index
    %c0_4 = arith.constant 0 : index
    %2 = vector.load %arg3[%c0_3, %c0_4] : memref<1x32xf32, #tpu.memory_space<vmem>>, vector<1x32xf32>
    %cst = arith.constant dense<0.000000e+00> : vector<8x32xf32>
    %3 = tpu.matmul %0, %1, %cst {dimension_numbers = #tpu.dot_dimension_numbers<[1], [0], [0], [1], [0, 0, 1, 1], [], []>} : vector<8x32xf32>, vector<32x32xf32>, vector<8x32xf32> -> vector<8x32xf32>
    %4 = vector.broadcast %2 : vector<1x32xf32> to vector<8x32xf32>
    %5 = arith.addf %3, %4 : vector<8x32xf32>
    %cst_5 = arith.constant 0.000000e+00 : f32
    %6 = vector.broadcast %cst_5 : f32 to vector<8x32xf32>
    %7 = arith.maximumf %5, %6 : vector<8x32xf32>
    %c0_6 = arith.constant 0 : index
    %c0_7 = arith.constant 0 : index
    %8 = vector.load %arg4[%c0_6, %c0_7] : memref<32x32xf32, #tpu.memory_space<vmem>>, vector<32x32xf32>
    %c0_8 = arith.constant 0 : index
    %c0_9 = arith.constant 0 : index
    %9 = vector.load %arg5[%c0_8, %c0_9] : memref<1x32xf32, #tpu.memory_space<vmem>>, vector<1x32xf32>
    %cst_10 = arith.constant dense<0.000000e+00> : vector<8x32xf32>
    %10 = tpu.matmul %7, %8, %cst_10 {dimension_numbers = #tpu.dot_dimension_numbers<[1], [0], [0], [1], [0, 0, 1, 1], [], []>} : vector<8x32xf32>, vector<32x32xf32>, vector<8x32xf32> -> vector<8x32xf32>
    %11 = vector.broadcast %9 : vector<1x32xf32> to vector<8x32xf32>
    %12 = arith.addf %10, %11 : vector<8x32xf32>
    %cst_11 = arith.constant 0.000000e+00 : f32
    %13 = vector.broadcast %cst_11 : f32 to vector<8x32xf32>
    %14 = arith.maximumf %12, %13 : vector<8x32xf32>
    %c0_12 = arith.constant 0 : index
    %c0_13 = arith.constant 0 : index
    %15 = vector.load %arg6[%c0_12, %c0_13] : memref<32x128xf32, #tpu.memory_space<vmem>>, vector<32x128xf32>
    %c0_14 = arith.constant 0 : index
    %c0_15 = arith.constant 0 : index
    %16 = vector.load %arg7[%c0_14, %c0_15] : memref<1x128xf32, #tpu.memory_space<vmem>>, vector<1x128xf32>
    %cst_16 = arith.constant dense<0.000000e+00> : vector<8x128xf32>
    %17 = tpu.matmul %14, %15, %cst_16 {dimension_numbers = #tpu.dot_dimension_numbers<[1], [0], [0], [1], [0, 0, 1, 1], [], []>} : vector<8x32xf32>, vector<32x128xf32>, vector<8x128xf32> -> vector<8x128xf32>
    %18 = vector.broadcast %16 : vector<1x128xf32> to vector<8x128xf32>
    %19 = arith.addf %17, %18 : vector<8x128xf32>
    %c0_17 = arith.constant 0 : index
    %c0_18 = arith.constant 0 : index
    %20 = vector.load %arg8[%c0_17, %c0_18] : memref<8x128xf32, #tpu.memory_space<vmem>>, vector<8x128xf32>
    tpu.vector_store %arg8[%c0_17, %c0_18], %19 {strides = array<i32>} : memref<8x128xf32, #tpu.memory_space<vmem>>, vector<8x128xf32>,
    return
  }
  func.func @transform_0(%arg0: i32) -> (i32, i32) {
    %c0_i32 = arith.constant 0 : i32
    %c0_i32_0 = arith.constant 0 : i32
    return %arg0, %c0_i32 : i32, i32
  }
  func.func @transform_1(%arg0: i32) -> (i32, i32) {
    %c0_i32 = arith.constant 0 : i32
    %c0_i32_0 = arith.constant 0 : i32
    %c0_i32_1 = arith.constant 0 : i32
    return %c0_i32, %c0_i32_0 : i32, i32
  }
  func.func @transform_2(%arg0: i32) -> (i32, i32) {
    %c0_i32 = arith.constant 0 : i32
    %c0_i32_0 = arith.constant 0 : i32
    %c0_i32_1 = arith.constant 0 : i32
    return %c0_i32, %c0_i32_0 : i32, i32
  }
  func.func @transform_3(%arg0: i32) -> (i32, i32) {
    %c0_i32 = arith.constant 0 : i32
    %c0_i32_0 = arith.constant 0 : i32
    %c0_i32_1 = arith.constant 0 : i32
    return %c0_i32, %c0_i32_0 : i32, i32
  }
  func.func @transform_4(%arg0: i32) -> (i32, i32) {
    %c0_i32 = arith.constant 0 : i32
    %c0_i32_0 = arith.constant 0 : i32
    %c0_i32_1 = arith.constant 0 : i32
    return %c0_i32, %c0_i32_0 : i32, i32
  }
  func.func @transform_5(%arg0: i32) -> (i32, i32) {
    %c0_i32 = arith.constant 0 : i32
    %c0_i32_0 = arith.constant 0 : i32
    %c0_i32_1 = arith.constant 0 : i32
    return %c0_i32, %c0_i32_0 : i32, i32
  }
  func.func @transform_6(%arg0: i32) -> (i32, i32) {
    %c0_i32 = arith.constant 0 : i32
    %c0_i32_0 = arith.constant 0 : i32
    %c0_i32_1 = arith.constant 0 : i32
    return %c0_i32, %c0_i32_0 : i32, i32
  }
  func.func @transform_7(%arg0: i32) -> (i32, i32) {
    %c0_i32 = arith.constant 0 : i32
    %c0_i32_0 = arith.constant 0 : i32
    return %arg0, %c0_i32 : i32, i32
  }
}

</mosaic_0001>

<llo_original>
// kernel: tpu_custom_call.1
$region0: #{tpu_custom_call.1}
  #allocation0 [shape = 'u32[]', space=smem, size = 0x4, offset = 0x4, fixed_abs, tag = 'smem constant byte address 0x4 - core index']
  #allocation1 [shape = 'u32[144,128]{1,0:T(1,128)}', space=vmem, size = 0x12000, scoped, tag = 'internal scratch']
  %s0 = inlined_call_operand.hbm [shape: f32[16,32], index: 0, kind: input, shape index: {}]
  %s1 = inlined_call_operand.hbm [shape: f32[32,32], index: 1, kind: input, shape index: {}]
  %s2 = inlined_call_operand.vmem [shape: f32[1,32], index: 2, kind: input, shape index: {}]
  %s3 = inlined_call_operand.hbm [shape: f32[32,32], index: 3, kind: input, shape index: {}]
  %s4 = inlined_call_operand.vmem [shape: f32[1,32], index: 4, kind: input, shape index: {}]
  %s5 = inlined_call_operand.hbm [shape: f32[32,128], index: 5, kind: input, shape index: {}]
  %s6 = inlined_call_operand.vmem [shape: f32[1,128], index: 6, kind: input, shape index: {}]
  %s7 = inlined_call_operand.hbm [shape: f32[16,128], index: 7, kind: output, shape index: {}]
  %s8 = sld [smem:[#allocation0]]
  $region77: #{tpu_custom_call.1} parent=0
    _
  %s10 = ssub.s32 1, %s8
  %s11 = scalar_select 0, %s10, %s8
  $region1: #{tpu_custom_call.1} parent=0
    #allocation2 [shape = 'u8[8192]{0}', space=vmem, size = 0x2000, scoped, tag = 'input window, operand 0']
    #allocation3 [shape = 's32[2]{0}', space=sflag, size = 0x8, scoped, tag = 'scoped memory for tpu_custom_call.1']
    #allocation4 [shape = 's32[2]{0}', space=sflag, size = 0x8, scoped, tag = 'scoped memory for tpu_custom_call.1']
    #allocation5 [shape = 'u8[16384]{0}', space=vmem, size = 0x4000, scoped, tag = 'input window, operand 1, single buffered']
    #allocation6 [shape = 's32[1]{0}', space=sflag, size = 0x4, scoped, tag = 'scoped memory for tpu_custom_call.1']
    #allocation7 [shape = 'u8[16384]{0}', space=vmem, size = 0x4000, scoped, tag = 'input window, operand 3, single buffered']
    #allocation8 [shape = 'u8[16384]{0}', space=vmem, size = 0x4000, scoped, tag = 'input window, operand 5, single buffered']
    #allocation9 [shape = 's32[1]{0}', space=sflag, size = 0x4, scoped, tag = 'scoped memory for tpu_custom_call.1']
    #allocation10 [shape = 'u8[8192]{0}', space=vmem, size = 0x2000, scoped, tag = 'output window, operand 0']
    %12 = vsyncpa [#allocation3], 0
    %s13 = scalar_lea.sflag [#allocation3], 1
    %14 = vsyncpa %s13, 0
    %15 = vsyncpa [#allocation6], 0
    %16 = vsyncpa [#allocation9], 0
    %17 = vsyncpa [#allocation4], 0
    %s18 = scalar_lea.sflag [#allocation4], 1
    %19 = vsyncpa %s18, 0
    loop: start=0, step=1, limit=4
    $region2: #{tpu_custom_call.1} parent=1 // loop_pre_header
      _
    $region3: #{tpu_custom_call.1} parent=1 // loop_header
      %s21 = sphi 0, %s25
      %p22 = scmp.ge.s32.totalorder %s21, 4
      %s31 = sphi 0, %s33
      %s34 = sphi 0, %s31
      %s35 = sphi 0, %s34
      %s51 = sphi 0, %s35
      %s55 = sphi 0, %s55
      %s57 = sphi 0, %s55
      %s58 = sphi 0, %s57
      %s72 = sphi 0, %s58
      %s76 = sphi 0, %s76
      %s78 = sphi 0, %s76
      %s79 = sphi 0, %s78
      %s93 = sphi 0, %s79
      %s97 = sphi 0, %s97
      %s99 = sphi 0, %s97
      %s100 = sphi 0, %s99
      %s114 = sphi 0, %s100
      %s118 = sphi 0, %s118
      %s120 = sphi 0, %s118
      %s121 = sphi 0, %s120
      %s135 = sphi 0, %s121
      %s139 = sphi 0, %s139
      %s141 = sphi 0, %s139
      %s142 = sphi 0, %s141
      %s156 = sphi 0, %s142
      %s160 = sphi 0, %s160
      %s162 = sphi 0, %s160
      %s163 = sphi 0, %s162
      %s177 = sphi 0, %s163
      %s183 = sphi 0, %s185
      %s186 = sphi 0, %s183
      %s187 = sphi 0, %s186
      %s203 = sphi 0, %s187
    $region4: #{tpu_custom_call.1} parent=1 // loop_header_branch
      %24 = sbr.rel (%p22) target = $region8
    $region5: #{tpu_custom_call.1} parent=1 // loop_body
      %s26 = ssub.s32 %s21, 1
      %s27 = ssub.s32 %s21, 2
      %s28 = sadd.s32 %s21, 1
      %s29 = ssub.s32 %s21, %s28
      %p30 = scmp.eq.s32.totalorder %s29, 0
      %s32 = sadd.s32 %s31, 1
      %s33 = scalar_select %p30, %s31, %s32
      %p36 = pneg %p30
      %p37 = scmp.eq.s32.totalorder %s21, 1
      %p38 = por %p36, %p37
      %p39 = scmp.ne.s32.totalorder %s31, %s34
      %p40 = scmp.eq.s32.totalorder %s21, 0
      %p41 = por %p39, %p40
      %p42 = scmp.ne.s32.totalorder %s31, %s34
      %p43 = scmp.eq.s32.totalorder %s26, 1
      %p44 = por %p42, %p43
      %p45 = scmp.ne.s32.totalorder %s34, %s35
      %p46 = scmp.eq.s32.totalorder %s26, 0
      %p47 = por %p45, %p46
      %p48 = scmp.ne.s32.totalorder %s34, %s35
      %p49 = scmp.eq.s32.totalorder %s27, 1
      %p50 = por %p48, %p49
      %p52 = scmp.ne.s32.totalorder %s35, %s51
      %p53 = scmp.eq.s32.totalorder %s27, 0
      %p54 = por %p52, %p53
      %s56 = sadd.s32 %s55, 1
      %p59 = scmp.eq.s32.totalorder %s21, 1
      %p60 = scmp.ne.s32.totalorder %s55, %s57
      %p61 = scmp.eq.s32.totalorder %s21, 0
      %p62 = por %p60, %p61
      %p63 = scmp.ne.s32.totalorder %s55, %s57
      %p64 = scmp.eq.s32.totalorder %s26, 1
      %p65 = por %p63, %p64
      %p66 = scmp.ne.s32.totalorder %s57, %s58
      %p67 = scmp.eq.s32.totalorder %s26, 0
      %p68 = por %p66, %p67
      %p69 = scmp.ne.s32.totalorder %s57, %s58
      %p70 = scmp.eq.s32.totalorder %s27, 1
      %p71 = por %p69, %p70
      %p73 = scmp.ne.s32.totalorder %s58, %s72
      %p74 = scmp.eq.s32.totalorder %s27, 0
      %p75 = por %p73, %p74
      %s77 = sadd.s32 %s76, 1
      %p80 = scmp.eq.s32.totalorder %s21, 1
      %p81 = scmp.ne.s32.totalorder %s76, %s78
      %p82 = scmp.eq.s32.totalorder %s21, 0
      %p83 = por %p81, %p82
      %p84 = scmp.ne.s32.totalorder %s76, %s78
      %p85 = scmp.eq.s32.totalorder %s26, 1
      %p86 = por %p84, %p85
      %p87 = scmp.ne.s32.totalorder %s78, %s79
      %p88 = scmp.eq.s32.totalorder %s26, 0
      %p89 = por %p87, %p88
      %p90 = scmp.ne.s32.totalorder %s78, %s79
      %p91 = scmp.eq.s32.totalorder %s27, 1
      %p92 = por %p90, %p91
      %p94 = scmp.ne.s32.totalorder %s79, %s93
      %p95 = scmp.eq.s32.totalorder %s27, 0
      %p96 = por %p94, %p95
      %s98 = sadd.s32 %s97, 1
      %p101 = scmp.eq.s32.totalorder %s21, 1
      %p102 = scmp.ne.s32.totalorder %s97, %s99
      %p103 = scmp.eq.s32.totalorder %s21, 0
      %p104 = por %p102, %p103
      %p105 = scmp.ne.s32.totalorder %s97, %s99
      %p106 = scmp.eq.s32.totalorder %s26, 1
      %p107 = por %p105, %p106
      %p108 = scmp.ne.s32.totalorder %s99, %s100
      %p109 = scmp.eq.s32.totalorder %s26, 0
      %p110 = por %p108, %p109
      %p111 = scmp.ne.s32.totalorder %s99, %s100
      %p112 = scmp.eq.s32.totalorder %s27, 1
      %p113 = por %p111, %p112
      %p115 = scmp.ne.s32.totalorder %s100, %s114
      %p116 = scmp.eq.s32.totalorder %s27, 0
      %p117 = por %p115, %p116
      %s119 = sadd.s32 %s118, 1
      %p122 = scmp.eq.s32.totalorder %s21, 1
      %p123 = scmp.ne.s32.totalorder %s118, %s120
      %p124 = scmp.eq.s32.totalorder %s21, 0
      %p125 = por %p123, %p124
      %p126 = scmp.ne.s32.totalorder %s118, %s120
      %p127 = scmp.eq.s32.totalorder %s26, 1
      %p128 = por %p126, %p127
      %p129 = scmp.ne.s32.totalorder %s120, %s121
      %p130 = scmp.eq.s32.totalorder %s26, 0
      %p131 = por %p129, %p130
      %p132 = scmp.ne.s32.totalorder %s120, %s121
      %p133 = scmp.eq.s32.totalorder %s27, 1
      %p134 = por %p132, %p133
      %p136 = scmp.ne.s32.totalorder %s121, %s135
      %p137 = scmp.eq.s32.totalorder %s27, 0
      %p138 = por %p136, %p137
      %s140 = sadd.s32 %s139, 1
      %p143 = scmp.eq.s32.totalorder %s21, 1
      %p144 = scmp.ne.s32.totalorder %s139, %s141
      %p145 = scmp.eq.s32.totalorder %s21, 0
      %p146 = por %p144, %p145
      %p147 = scmp.ne.s32.totalorder %s139, %s141
      %p148 = scmp.eq.s32.totalorder %s26, 1
      %p149 = por %p147, %p148
      %p150 = scmp.ne.s32.totalorder %s141, %s142
      %p151 = scmp.eq.s32.totalorder %s26, 0
      %p152 = por %p150, %p151
      %p153 = scmp.ne.s32.totalorder %s141, %s142
      %p154 = scmp.eq.s32.totalorder %s27, 1
      %p155 = por %p153, %p154
      %p157 = scmp.ne.s32.totalorder %s142, %s156
      %p158 = scmp.eq.s32.totalorder %s27, 0
      %p159 = por %p157, %p158
      %s161 = sadd.s32 %s160, 1
      %p164 = scmp.eq.s32.totalorder %s21, 1
      %p165 = scmp.ne.s32.totalorder %s160, %s162
      %p166 = scmp.eq.s32.totalorder %s21, 0
      %p167 = por %p165, %p166
      %p168 = scmp.ne.s32.totalorder %s160, %s162
      %p169 = scmp.eq.s32.totalorder %s26, 1
      %p170 = por %p168, %p169
      %p171 = scmp.ne.s32.totalorder %s162, %s163
      %p172 = scmp.eq.s32.totalorder %s26, 0
      %p173 = por %p171, %p172
      %p174 = scmp.ne.s32.totalorder %s162, %s163
      %p175 = scmp.eq.s32.totalorder %s27, 1
      %p176 = por %p174, %p175
      %p178 = scmp.ne.s32.totalorder %s163, %s177
      %p179 = scmp.eq.s32.totalorder %s27, 0
      %p180 = por %p178, %p179
      %s181 = ssub.s32 %s21, %s28
      %p182 = scmp.eq.s32.totalorder %s181, 0
      %s184 = sadd.s32 %s183, 1
      %s185 = scalar_select %p182, %s183, %s184
      %p188 = pneg %p182
      %p189 = scmp.eq.s32.totalorder %s21, 1
      %p190 = por %p188, %p189
      %p191 = scmp.ne.s32.totalorder %s183, %s186
      %p192 = scmp.eq.s32.totalorder %s21, 0
      %p193 = por %p191, %p192
      %p194 = scmp.ne.s32.totalorder %s183, %s186
      %p195 = scmp.eq.s32.totalorder %s26, 1
      %p196 = por %p194, %p195
      %p197 = scmp.ne.s32.totalorder %s186, %s187
      %p198 = scmp.eq.s32.totalorder %s26, 0
      %p199 = por %p197, %p198
      %p200 = scmp.ne.s32.totalorder %s186, %s187
      %p201 = scmp.eq.s32.totalorder %s27, 1
      %p202 = por %p200, %p201
      %p204 = scmp.ne.s32.totalorder %s187, %s203
      %p205 = scmp.eq.s32.totalorder %s27, 0
      %p206 = por %p204, %p205
      %p207 = scmp.le.s32.totalorder 1, %s21
      %p208 = scmp.lt.s32.totalorder %s21, 3
      %p209 = pnand %p207, %p208
      %p210 = pneg %p209
      // Predicated region
      $region9: #{tpu_custom_call.1} parent=5 // pred_check
        _
      $region10: #{tpu_custom_call.1} parent=5 // pred_check_branch
        %212 = sbr.rel (%p209) target = $region12
      $region11: #{tpu_custom_call.1} parent=5 // pred_region
        %s213 = ssub.s32 %s21, 1
        // Predicated region
        $region13: #{tpu_custom_call.1} parent=11 // pred_check
          %p214 = pneg %p68
        $region14: #{tpu_custom_call.1} parent=11 // pred_check_branch
          %216 = sbr.rel (%p214) target = $region16
        $region15: #{tpu_custom_call.1} parent=11 // pred_region
          %s218 = ssub.s32 512, 512
          %219 = vsyncadd [#allocation6], %s218
          %s220 = sshll.u32 [#allocation5], 4
          %s221 = int_to_ptr.vmem [resolvable:$true] %s220
          %226 = dma.hbm_to_vmem [thread:$0]  %s1, 512, %s221, [#allocation6], 128, 128, 8
        $region16: #{tpu_custom_call.1} parent=11 // pred_fallthru
          _
        // Predicated region
        $region17: #{tpu_custom_call.1} parent=11 // pred_check
          %p227 = pneg %p89
        $region18: #{tpu_custom_call.1} parent=11 // pred_check_branch
          %229 = sbr.rel (%p227) target = $region20
        $region19: #{tpu_custom_call.1} parent=11 // pred_region
          _
        $region20: #{tpu_custom_call.1} parent=11 // pred_fallthru
          _
        // Predicated region
        $region21: #{tpu_custom_call.1} parent=11 // pred_check
          %p230 = pneg %p110
        $region22: #{tpu_custom_call.1} parent=11 // pred_check_branch
          %232 = sbr.rel (%p230) target = $region24
        $region23: #{tpu_custom_call.1} parent=11 // pred_region
          %s234 = ssub.s32 512, 512
          %235 = vsyncadd [#allocation6], %s234
          %s236 = sshll.u32 [#allocation7], 4
          %s237 = int_to_ptr.vmem [resolvable:$true] %s236
          %242 = dma.hbm_to_vmem [thread:$0]  %s3, 512, %s237, [#allocation6], 128, 128, 8
        $region24: #{tpu_custom_call.1} parent=11 // pred_fallthru
          _
        // Predicated region
        $region25: #{tpu_custom_call.1} parent=11 // pred_check
          %p243 = pneg %p131
        $region26: #{tpu_custom_call.1} parent=11 // pred_check_branch
          %245 = sbr.rel (%p243) target = $region28
        $region27: #{tpu_custom_call.1} parent=11 // pred_region
          _
        $region28: #{tpu_custom_call.1} parent=11 // pred_fallthru
          _
        // Predicated region
        $region29: #{tpu_custom_call.1} parent=11 // pred_check
          %p246 = pneg %p152
        $region30: #{tpu_custom_call.1} parent=11 // pred_check_branch
          %248 = sbr.rel (%p246) target = $region32
        $region31: #{tpu_custom_call.1} parent=11 // pred_region
          %s250 = ssub.s32 512, 512
          %251 = vsyncadd [#allocation9], %s250
          %s252 = sshll.u32 [#allocation8], 4
          %s253 = int_to_ptr.vmem [resolvable:$true] %s252
          %258 = dma.hbm_to_vmem [thread:$0]  %s5, 512, %s253, [#allocation9], 128, 128, 8
        $region32: #{tpu_custom_call.1} parent=11 // pred_fallthru
          _
        // Predicated region
        $region33: #{tpu_custom_call.1} parent=11 // pred_check
          %p259 = pneg %p173
        $region34: #{tpu_custom_call.1} parent=11 // pred_check_branch
          %261 = sbr.rel (%p259) target = $region36
        $region35: #{tpu_custom_call.1} parent=11 // pred_region
          _
        $region36: #{tpu_custom_call.1} parent=11 // pred_fallthru
          _
      $region12: #{tpu_custom_call.1} parent=5 // pred_fallthru
        _
      %p262 = scmp.lt.s32.totalorder %s21, 2
      // Predicated region
      $region37: #{tpu_custom_call.1} parent=5 // pred_check
        %p263 = pneg %p262
      $region38: #{tpu_custom_call.1} parent=5 // pred_check_branch
        %265 = sbr.rel (%p263) target = $region40
      $region39: #{tpu_custom_call.1} parent=5 // pred_region
        // Predicated region
        $region41: #{tpu_custom_call.1} parent=39 // pred_check
          %p266 = pneg %p41
        $region42: #{tpu_custom_call.1} parent=39 // pred_check_branch
          %268 = sbr.rel (%p266) target = $region44
        $region43: #{tpu_custom_call.1} parent=39 // pred_region
          %s269 = sand.u32 %s31, 1
          %s270 = scalar_lea.sflag [#allocation3], %s269
          %s271 = sand.u32 %s31, 1
          %s272 = smul.addr %s271, 8
          %s273 = scalar_lea.vmem [#allocation2], %s272
          %s275 = ssub.s32 128, 128
          %276 = vsyncadd %s270, %s275
          %s277 = smul.addr %s21, 128
          %s278 = scalar_lea.hbm %s0, %s277
          %s280 = sshll.u32 %s273, 4
          %s281 = int_to_ptr.vmem [resolvable:$true] %s280
          %283 = dma.hbm_to_vmem [thread:$0]  %s278, 128, %s281, %s270
        $region44: #{tpu_custom_call.1} parent=39 // pred_fallthru
          _
      $region40: #{tpu_custom_call.1} parent=5 // pred_fallthru
        _
      %p284 = scmp.le.s32.totalorder 1, %s21
      %p285 = scmp.lt.s32.totalorder %s21, 3
      %p286 = pnand %p284, %p285
      %p287 = pneg %p286
      // Predicated region
      $region45: #{tpu_custom_call.1} parent=5 // pred_check
        _
      $region46: #{tpu_custom_call.1} parent=5 // pred_check_branch
        %289 = sbr.rel (%p286) target = $region48
      $region47: #{tpu_custom_call.1} parent=5 // pred_region
        %s290 = ssub.s32 %s21, 1
        %s291 = sand.u32 %s34, 1
        %s292 = scalar_lea.sflag [#allocation3], %s291
        %s293 = sand.u32 %s34, 1
        %s294 = smul.addr %s293, 8
        %s295 = scalar_lea.vmem [#allocation2], %s294
        // Predicated region
        $region49: #{tpu_custom_call.1} parent=47 // pred_check
          %p296 = pneg %p47
        $region50: #{tpu_custom_call.1} parent=47 // pred_check_branch
          %298 = sbr.rel (%p296) target = $region52
        $region51: #{tpu_custom_call.1} parent=47 // pred_region
          %299 = dma.done %s292, 128
        $region52: #{tpu_custom_call.1} parent=47 // pred_fallthru
          _
        // Predicated region
        $region53: #{tpu_custom_call.1} parent=47 // pred_check
          %p300 = pneg %p68
        $region54: #{tpu_custom_call.1} parent=47 // pred_check_branch
          %302 = sbr.rel (%p300) target = $region56
        $region55: #{tpu_custom_call.1} parent=47 // pred_region
          %303 = dma.done [#allocation6], 512
        $region56: #{tpu_custom_call.1} parent=47 // pred_fallthru
          _
        // Predicated region
        $region57: #{tpu_custom_call.1} parent=47 // pred_check
          %p304 = pneg %p110
        $region58: #{tpu_custom_call.1} parent=47 // pred_check_branch
          %306 = sbr.rel (%p304) target = $region60
        $region59: #{tpu_custom_call.1} parent=47 // pred_region
          %307 = dma.done [#allocation6], 512
        $region60: #{tpu_custom_call.1} parent=47 // pred_fallthru
          _
        // Predicated region
        $region61: #{tpu_custom_call.1} parent=47 // pred_check
          %p308 = pneg %p152
        $region62: #{tpu_custom_call.1} parent=47 // pred_check_branch
          %310 = sbr.rel (%p308) target = $region64
        $region63: #{tpu_custom_call.1} parent=47 // pred_region
          %311 = dma.done [#allocation9], 512
        $region64: #{tpu_custom_call.1} parent=47 // pred_fallthru
          _
        %s312 = sand.u32 %s34, 1
        %s313 = scalar_lea.sflag [#allocation3], %s312
        %s314 = sand.u32 %s34, 1
        %s315 = smul.addr %s314, 8
        %s316 = scalar_lea.vmem [#allocation2], %s315
        %p317 = pneg %p47
        %p318 = pneg %p44
        %p319 = pneg %p68
        %p320 = pneg %p65
        %p321 = pneg %p89
        %p322 = pneg %p86
        %p323 = pneg %p110
        %p324 = pneg %p107
        %p325 = pneg %p131
        %p326 = pneg %p128
        %p327 = pneg %p152
        %p328 = pneg %p149
        %p329 = pneg %p173
        %p330 = pneg %p170
        %p331 = pneg %p199
        %p332 = pneg %p196
        %s333 = sand.u32 %s186, 1
        %s334 = scalar_lea.sflag [#allocation4], %s333
        %s335 = sand.u32 %s186, 1
        %s336 = smul.addr %s335, 8
        %s337 = scalar_lea.vmem [#allocation10], %s336
        %v338 = vld [vmem:[%s295] sm:$0xff]
        %v339 = vld [vmem:[#allocation5] sm:$0xff]
        %v340 = vld [vmem:[#allocation5 + $0x8] sm:$0xff]
        %v341 = vld [vmem:[#allocation5 + $0x10] sm:$0xff]
        %v342 = vld [vmem:[#allocation5 + $0x18] sm:$0xff]
        %v343 = vld [vmem:[%s2] sm:$0x1]
        %v345 = vlaneseq
        %v346 = vshrl.u32 %v345, 7
        %v347 = vsub.s32 0, %v346
        %v348 = vrot.slane %v343, %v347
        %vm350 = vcmask 261120
        %v352 = vsel %vm350, %v338, 0
        %354 = vmatprep.subr.mxu0 0.0
        %355 = vmatpush1.msra.mxu0 %v339
        %356 = vmatprep.subr.mxu0 0.0
        %357 = vmatpush1.msra.mxu0 %v340
        %358 = vmatprep.subr.mxu0 0.0
        %359 = vmatpush1.msra.mxu0 %v341
        %360 = vmatprep.subr.mxu0 0.0
        %361 = vmatpush1.msra.mxu0 %v342
        %362 = vmatprep.subr.mxu0 0.0
        %363 = vmatpush1.msra.mxu0 0.0
        %364 = vmatprep.subr.mxu0 0.0
        %365 = vmatpush1.msra.mxu0 0.0
        %366 = vmatprep.subr.mxu0 0.0
        %367 = vmatpush1.msra.mxu0 0.0
        %368 = vmatprep.subr.mxu0 0.0
        %369 = vmatpush1.msra.mxu0 0.0
        %370 = vmatprep.subr.mxu0 0.0
        %371 = vmatpush1.msra.mxu0 0.0
        %372 = vmatprep.subr.mxu0 0.0
        %373 = vmatpush1.msra.mxu0 0.0
        %374 = vmatprep.subr.mxu0 0.0
        %375 = vmatpush1.msra.mxu0 0.0
        %376 = vmatprep.subr.mxu0 0.0
        %377 = vmatpush1.msra.mxu0 0.0
        %378 = vmatprep.subr.mxu0 0.0
        %379 = vmatpush1.msra.mxu0 0.0
        %380 = vmatprep.subr.mxu0 0.0
        %381 = vmatpush1.msra.mxu0 0.0
        %382 = vmatprep.subr.mxu0 0.0
        %383 = vmatpush1.msra.mxu0 0.0
        %384 = vmatprep.subr.mxu0 0.0
        %385 = vmatpush1.msra.mxu0 0.0
        %386 = vmatprep.subr.mxu0 0.0
        %387 = vmatpush1.msra.mxu0 0.0
        %388 = vmatprep.subr.mxu0 0.0
        %389 = vmatpush1.msra.mxu0 0.0
        %390 = vmatprep.subr.mxu0 0.0
        %391 = vmatpush1.msra.mxu0 0.0
        %392 = vmatprep.subr.mxu0 0.0
        %393 = vmatpush1.msra.mxu0 0.0
        %394 = vmatprep.subr.mxu0 0.0
        %395 = vmatpush1.msra.mxu0 0.0
        %396 = vmatprep.subr.mxu0 0.0
        %397 = vmatpush1.msra.mxu0 0.0
        %398 = vmatprep.subr.mxu0 0.0
        %399 = vmatpush1.msra.mxu0 0.0
        %400 = vmatprep.subr.mxu0 0.0
        %401 = vmatpush1.msra.mxu0 0.0
        %402 = vmatprep.subr.mxu0 0.0
        %403 = vmatpush1.msra.mxu0 0.0
        %404 = vmatprep.subr.mxu0 0.0
        %405 = vmatpush1.msra.mxu0 0.0
        %406 = vmatprep.subr.mxu0 0.0
        %407 = vmatpush1.msra.mxu0 0.0
        %408 = vmatprep.subr.mxu0 0.0
        %409 = vmatpush1.msra.mxu0 0.0
        %410 = vmatprep.subr.mxu0 0.0
        %411 = vmatpush1.msra.mxu0 0.0
        %412 = vmatprep.subr.mxu0 0.0
        %413 = vmatpush1.msra.mxu0 0.0
        %414 = vmatprep.subr.mxu0 0.0
        %415 = vmatpush1.msra.mxu0 0.0
        %416 = vmatprep.subr.mxu0 0.0
        %417 = vmatpush1.msra.mxu0 0.0
        %418 = vmatprep.mubr.f32.mxu0 0.0
        %419 = vmatmul.mubr.f32.gmra.mrb[0].mxu0 %v352
        %v420 = vpop.f32.mrb[0].mxu0
        %v421 = vadd.f32 %v348, %v420
        %v422 = vpop.f32.mrb[0].mxu0
        %423 = vdwg.mxu0
        %v424 = vmax.f32 %v421, 0.0
        %v425 = vld [vmem:[#allocation7] sm:$0xff]
        %v426 = vld [vmem:[#allocation7 + $0x8] sm:$0xff]
        %v427 = vld [vmem:[#allocation7 + $0x10] sm:$0xff]
        %v428 = vld [vmem:[#allocation7 + $0x18] sm:$0xff]
        %v429 = vld [vmem:[%s4] sm:$0x1]
        %v431 = vlaneseq
        %v432 = vshrl.u32 %v431, 7
        %v433 = vsub.s32 0, %v432
        %v434 = vrot.slane %v429, %v433
        %v437 = vsel %vm350, %v424, 0
        %439 = vmatprep.subr.mxu0 0.0
        %440 = vmatpush1.msra.mxu0 %v425
        %441 = vmatprep.subr.mxu0 0.0
        %442 = vmatpush1.msra.mxu0 %v426
        %443 = vmatprep.subr.mxu0 0.0
        %444 = vmatpush1.msra.mxu0 %v427
        %445 = vmatprep.subr.mxu0 0.0
        %446 = vmatpush1.msra.mxu0 %v428
        %447 = vmatprep.subr.mxu0 0.0
        %448 = vmatpush1.msra.mxu0 0.0
        %449 = vmatprep.subr.mxu0 0.0
        %450 = vmatpush1.msra.mxu0 0.0
        %451 = vmatprep.subr.mxu0 0.0
        %452 = vmatpush1.msra.mxu0 0.0
        %453 = vmatprep.subr.mxu0 0.0
        %454 = vmatpush1.msra.mxu0 0.0
        %455 = vmatprep.subr.mxu0 0.0
        %456 = vmatpush1.msra.mxu0 0.0
        %457 = vmatprep.subr.mxu0 0.0
        %458 = vmatpush1.msra.mxu0 0.0
        %459 = vmatprep.subr.mxu0 0.0
        %460 = vmatpush1.msra.mxu0 0.0
        %461 = vmatprep.subr.mxu0 0.0
        %462 = vmatpush1.msra.mxu0 0.0
        %463 = vmatprep.subr.mxu0 0.0
        %464 = vmatpush1.msra.mxu0 0.0
        %465 = vmatprep.subr.mxu0 0.0
        %466 = vmatpush1.msra.mxu0 0.0
        %467 = vmatprep.subr.mxu0 0.0
        %468 = vmatpush1.msra.mxu0 0.0
        %469 = vmatprep.subr.mxu0 0.0
        %470 = vmatpush1.msra.mxu0 0.0
        %471 = vmatprep.subr.mxu0 0.0
        %472 = vmatpush1.msra.mxu0 0.0
        %473 = vmatprep.subr.mxu0 0.0
        %474 = vmatpush1.msra.mxu0 0.0
        %475 = vmatprep.subr.mxu0 0.0
        %476 = vmatpush1.msra.mxu0 0.0
        %477 = vmatprep.subr.mxu0 0.0
        %478 = vmatpush1.msra.mxu0 0.0
        %479 = vmatprep.subr.mxu0 0.0
        %480 = vmatpush1.msra.mxu0 0.0
        %481 = vmatprep.subr.mxu0 0.0
        %482 = vmatpush1.msra.mxu0 0.0
        %483 = vmatprep.subr.mxu0 0.0
        %484 = vmatpush1.msra.mxu0 0.0
        %485 = vmatprep.subr.mxu0 0.0
        %486 = vmatpush1.msra.mxu0 0.0
        %487 = vmatprep.subr.mxu0 0.0
        %488 = vmatpush1.msra.mxu0 0.0
        %489 = vmatprep.subr.mxu0 0.0
        %490 = vmatpush1.msra.mxu0 0.0
        %491 = vmatprep.subr.mxu0 0.0
        %492 = vmatpush1.msra.mxu0 0.0
        %493 = vmatprep.subr.mxu0 0.0
        %494 = vmatpush1.msra.mxu0 0.0
        %495 = vmatprep.subr.mxu0 0.0
        %496 = vmatpush1.msra.mxu0 0.0
        %497 = vmatprep.subr.mxu0 0.0
        %498 = vmatpush1.msra.mxu0 0.0
        %499 = vmatprep.subr.mxu0 0.0
        %500 = vmatpush1.msra.mxu0 0.0
        %501 = vmatprep.subr.mxu0 0.0
        %502 = vmatpush1.msra.mxu0 0.0
        %503 = vmatprep.mubr.f32.mxu0 0.0
        %504 = vmatmul.mubr.f32.gmra.mrb[0].mxu0 %v437
        %v505 = vpop.f32.mrb[0].mxu0
        %v506 = vadd.f32 %v434, %v505
        %v507 = vpop.f32.mrb[0].mxu0
        %508 = vdwg.mxu0
        %v509 = vmax.f32 %v506, 0.0
        %v510 = vld [vmem:[#allocation8] sm:$0xff]
        %v511 = vld [vmem:[#allocation8 + $0x8] sm:$0xff]
        %v512 = vld [vmem:[#allocation8 + $0x10] sm:$0xff]
        %v513 = vld [vmem:[#allocation8 + $0x18] sm:$0xff]
        %v514 = vld [vmem:[%s6] sm:$0x1]
        %v516 = vlaneseq
        %v517 = vshrl.u32 %v516, 7
        %v518 = vsub.s32 0, %v517
        %v519 = vrot.slane %v514, %v518
        %v522 = vsel %vm350, %v509, 0
        %524 = vmatprep.subr.mxu0 0.0
        %525 = vmatpush1.msra.mxu0 %v510
        %526 = vmatprep.subr.mxu0 0.0
        %527 = vmatpush1.msra.mxu0 %v511
        %528 = vmatprep.subr.mxu0 0.0
        %529 = vmatpush1.msra.mxu0 %v512
        %530 = vmatprep.subr.mxu0 0.0
        %531 = vmatpush1.msra.mxu0 %v513
        %532 = vmatprep.subr.mxu0 0.0
        %533 = vmatpush1.msra.mxu0 0.0
        %534 = vmatprep.subr.mxu0 0.0
        %535 = vmatpush1.msra.mxu0 0.0
        %536 = vmatprep.subr.mxu0 0.0
        %537 = vmatpush1.msra.mxu0 0.0
        %538 = vmatprep.subr.mxu0 0.0
        %539 = vmatpush1.msra.mxu0 0.0
        %540 = vmatprep.subr.mxu0 0.0
        %541 = vmatpush1.msra.mxu0 0.0
        %542 = vmatprep.subr.mxu0 0.0
        %543 = vmatpush1.msra.mxu0 0.0
        %544 = vmatprep.subr.mxu0 0.0
        %545 = vmatpush1.msra.mxu0 0.0
        %546 = vmatprep.subr.mxu0 0.0
        %547 = vmatpush1.msra.mxu0 0.0
        %548 = vmatprep.subr.mxu0 0.0
        %549 = vmatpush1.msra.mxu0 0.0
        %550 = vmatprep.subr.mxu0 0.0
        %551 = vmatpush1.msra.mxu0 0.0
        %552 = vmatprep.subr.mxu0 0.0
        %553 = vmatpush1.msra.mxu0 0.0
        %554 = vmatprep.subr.mxu0 0.0
        %555 = vmatpush1.msra.mxu0 0.0
        %556 = vmatprep.subr.mxu0 0.0
        %557 = vmatpush1.msra.mxu0 0.0
        %558 = vmatprep.subr.mxu0 0.0
        %559 = vmatpush1.msra.mxu0 0.0
        %560 = vmatprep.subr.mxu0 0.0
        %561 = vmatpush1.msra.mxu0 0.0
        %562 = vmatprep.subr.mxu0 0.0
        %563 = vmatpush1.msra.mxu0 0.0
        %564 = vmatprep.subr.mxu0 0.0
        %565 = vmatpush1.msra.mxu0 0.0
        %566 = vmatprep.subr.mxu0 0.0
        %567 = vmatpush1.msra.mxu0 0.0
        %568 = vmatprep.subr.mxu0 0.0
        %569 = vmatpush1.msra.mxu0 0.0
        %570 = vmatprep.subr.mxu0 0.0
        %571 = vmatpush1.msra.mxu0 0.0
        %572 = vmatprep.subr.mxu0 0.0
        %573 = vmatpush1.msra.mxu0 0.0
        %574 = vmatprep.subr.mxu0 0.0
        %575 = vmatpush1.msra.mxu0 0.0
        %576 = vmatprep.subr.mxu0 0.0
        %577 = vmatpush1.msra.mxu0 0.0
        %578 = vmatprep.subr.mxu0 0.0
        %579 = vmatpush1.msra.mxu0 0.0
        %580 = vmatprep.subr.mxu0 0.0
        %581 = vmatpush1.msra.mxu0 0.0
        %582 = vmatprep.subr.mxu0 0.0
        %583 = vmatpush1.msra.mxu0 0.0
        %584 = vmatprep.subr.mxu0 0.0
        %585 = vmatpush1.msra.mxu0 0.0
        %586 = vmatprep.subr.mxu0 0.0
        %587 = vmatpush1.msra.mxu0 0.0
        %588 = vmatprep.mubr.f32.mxu0 0.0
        %589 = vmatmul.mubr.f32.gmra.mrb[0].mxu0 %v522
        %v590 = vpop.f32.mrb[0].mxu0
        %v591 = vadd.f32 %v519, %v590
        %v592 = vpop.f32.mrb[0].mxu0
        %593 = vdwg.mxu0
        %594 = vst [vmem:[%s337] sm:$0xff] %v591
        %s595 = sand.u32 %s186, 1
        %s596 = scalar_lea.sflag [#allocation4], %s595
        %s597 = sand.u32 %s186, 1
        %s598 = smul.addr %s597, 8
        %s599 = scalar_lea.vmem [#allocation10], %s598
        // Predicated region
        $region65: #{tpu_custom_call.1} parent=47 // pred_check
          %p600 = pneg %p196
        $region66: #{tpu_custom_call.1} parent=47 // pred_check_branch
          %602 = sbr.rel (%p600) target = $region68
        $region67: #{tpu_custom_call.1} parent=47 // pred_region
          %s604 = ssub.s32 128, 128
          %605 = vsyncadd %s596, %s604
          %s606 = smul.addr %s26, 128
          %s607 = scalar_lea.hbm %s7, %s606
          %s609 = sshll.u32 %s599, 4
          %s610 = int_to_ptr.vmem [resolvable:$true] %s609
          %612 = dma.vmem_to_hbm [thread:$0]  %s610, 128, %s607, %s596
        $region68: #{tpu_custom_call.1} parent=47 // pred_fallthru
          _
      $region48: #{tpu_custom_call.1} parent=5 // pred_fallthru
        _
      %p613 = scmp.le.s32.totalorder 2, %s21
      // Predicated region
      $region69: #{tpu_custom_call.1} parent=5 // pred_check
        %p614 = pneg %p613
      $region70: #{tpu_custom_call.1} parent=5 // pred_check_branch
        %616 = sbr.rel (%p614) target = $region72
      $region71: #{tpu_custom_call.1} parent=5 // pred_region
        %s617 = ssub.s32 %s21, 2
        // Predicated region
        $region73: #{tpu_custom_call.1} parent=71 // pred_check
          %p618 = pneg %p202
        $region74: #{tpu_custom_call.1} parent=71 // pred_check_branch
          %620 = sbr.rel (%p618) target = $region76
        $region75: #{tpu_custom_call.1} parent=71 // pred_region
          %s621 = sand.u32 %s187, 1
          %s622 = scalar_lea.sflag [#allocation4], %s621
          %s623 = sand.u32 %s187, 1
          %s624 = smul.addr %s623, 8
          %s625 = scalar_lea.vmem [#allocation10], %s624
          %626 = dma.done %s622, 128
        $region76: #{tpu_custom_call.1} parent=71 // pred_fallthru
          _
      $region72: #{tpu_custom_call.1} parent=5 // pred_fallthru
        _
    $region6: #{tpu_custom_call.1} parent=1 // loop_footer
      %s25 = sadd.s32 1, %s21
    $region7: #{tpu_custom_call.1} parent=1 // loop_footer_branch
      %20 = sbr.rel target = $region3
    $region8: #{tpu_custom_call.1} parent=1 // loop_exit
      _
    %627 = vsyncpa [#allocation3], 1
    %s628 = scalar_lea.sflag [#allocation3], 1
    %629 = vsyncpa %s628, 1
    %630 = vsyncpa [#allocation6], 1
    %631 = vsyncpa [#allocation9], 1
    %632 = vsyncpa [#allocation4], 1
    %s633 = scalar_lea.sflag [#allocation4], 1
    %634 = vsyncpa %s633, 1

// kernel: tpu_custom_call.1
$region0: #{tpu_custom_call.1}
  #allocation0 [shape = 'u32[]', space=smem, size = 0x4, offset = 0x4, fixed_abs, tag = 'smem constant byte address 0x4 - core index']
  #allocation1 [shape = 'u32[144,128]{1,0:T(1,128)}', space=vmem, size = 0x12000, scoped, tag = 'internal scratch']
  %s0 = inlined_call_operand.hbm [shape: f32[16,32], index: 0, kind: input, shape index: {}]
  %s1 = inlined_call_operand.hbm [shape: f32[32,32], index: 1, kind: input, shape index: {}]
  %s2 = inlined_call_operand.vmem [shape: f32[1,32], index: 2, kind: input, shape index: {}]
  %s3 = inlined_call_operand.hbm [shape: f32[32,32], index: 3, kind: input, shape index: {}]
  %s4 = inlined_call_operand.vmem [shape: f32[1,32], index: 4, kind: input, shape index: {}]
  %s5 = inlined_call_operand.hbm [shape: f32[32,128], index: 5, kind: input, shape index: {}]
  %s6 = inlined_call_operand.vmem [shape: f32[1,128], index: 6, kind: input, shape index: {}]
  %s7 = inlined_call_operand.hbm [shape: f32[16,128], index: 7, kind: output, shape index: {}]
  %s8 = sld [smem:[#allocation0]]
  $region77: #{tpu_custom_call.1} parent=0
    _
  %s10 = ssub.s32 1, %s8
  %s11 = scalar_select 0, %s10, %s8
  $region1: #{tpu_custom_call.1} parent=0
    #allocation2 [shape = 'u8[8192]{0}', space=vmem, size = 0x2000, scoped, tag = 'input window, operand 0']
    #allocation3 [shape = 's32[2]{0}', space=sflag, size = 0x8, scoped, tag = 'scoped memory for tpu_custom_call.1']
    #allocation4 [shape = 's32[2]{0}', space=sflag, size = 0x8, scoped, tag = 'scoped memory for tpu_custom_call.1']
    #allocation5 [shape = 'u8[16384]{0}', space=vmem, size = 0x4000, scoped, tag = 'input window, operand 1, single buffered']
    #allocation6 [shape = 's32[1]{0}', space=sflag, size = 0x4, scoped, tag = 'scoped memory for tpu_custom_call.1']
    #allocation7 [shape = 'u8[16384]{0}', space=vmem, size = 0x4000, scoped, tag = 'input window, operand 3, single buffered']
    #allocation8 [shape = 'u8[16384]{0}', space=vmem, size = 0x4000, scoped, tag = 'input window, operand 5, single buffered']
    #allocation9 [shape = 's32[1]{0}', space=sflag, size = 0x4, scoped, tag = 'scoped memory for tpu_custom_call.1']
    #allocation10 [shape = 'u8[8192]{0}', space=vmem, size = 0x2000, scoped, tag = 'output window, operand 0']
    %12 = vsyncpa [#allocation3], 0
    %s13 = scalar_lea.sflag [#allocation3], 1
    %14 = vsyncpa %s13, 0
    %15 = vsyncpa [#allocation6], 0
    %16 = vsyncpa [#allocation9], 0
    %17 = vsyncpa [#allocation4], 0
    %s18 = scalar_lea.sflag [#allocation4], 1
    %19 = vsyncpa %s18, 0
    loop: start=0, step=1, limit=4
    $region2: #{tpu_custom_call.1} parent=1 // loop_pre_header
      _
    $region3: #{tpu_custom_call.1} parent=1 // loop_header
      %s21 = sphi 0, %s25
      %p22 = scmp.ge.s32.totalorder %s21, 4
      %s31 = sphi 0, %s33
      %s34 = sphi 0, %s31
      %s35 = sphi 0, %s34
      %s51 = sphi 0, %s35
      %s55 = sphi 0, %s55
      %s57 = sphi 0, %s55
      %s58 = sphi 0, %s57
      %s72 = sphi 0, %s58
      %s76 = sphi 0, %s76
      %s78 = sphi 0, %s76
      %s79 = sphi 0, %s78
      %s93 = sphi 0, %s79
      %s97 = sphi 0, %s97
      %s99 = sphi 0, %s97
      %s100 = sphi 0, %s99
      %s114 = sphi 0, %s100
      %s118 = sphi 0, %s118
      %s120 = sphi 0, %s118
      %s121 = sphi 0, %s120
      %s135 = sphi 0, %s121
      %s139 = sphi 0, %s139
      %s141 = sphi 0, %s139
      %s142 = sphi 0, %s141
      %s156 = sphi 0, %s142
      %s160 = sphi 0, %s160
      %s162 = sphi 0, %s160
      %s163 = sphi 0, %s162
      %s177 = sphi 0, %s163
      %s183 = sphi 0, %s185
      %s186 = sphi 0, %s183
      %s187 = sphi 0, %s186
      %s203 = sphi 0, %s187
    $region4: #{tpu_custom_call.1} parent=1 // loop_header_branch
      %24 = sbr.rel (%p22) target = $region8
    $region5: #{tpu_custom_call.1} parent=1 // loop_body
      %s26 = ssub.s32 %s21, 1
      %s27 = ssub.s32 %s21, 2
      %s28 = sadd.s32 %s21, 1
      %s29 = ssub.s32 %s21, %s28
      %p30 = scmp.eq.s32.totalorder %s29, 0
      %s32 = sadd.s32 %s31, 1
      %s33 = scalar_select %p30, %s31, %s32
      %p36 = pneg %p30
      %p37 = scmp.eq.s32.totalorder %s21, 1
      %p38 = por %p36, %p37
      %p39 = scmp.ne.s32.totalorder %s31, %s34
      %p40 = scmp.eq.s32.totalorder %s21, 0
      %p41 = por %p39, %p40
      %p42 = scmp.ne.s32.totalorder %s31, %s34
      %p43 = scmp.eq.s32.totalorder %s26, 1
      %p44 = por %p42, %p43
      %p45 = scmp.ne.s32.totalorder %s34, %s35
      %p46 = scmp.eq.s32.totalorder %s26, 0
      %p47 = por %p45, %p46
      %p48 = scmp.ne.s32.totalorder %s34, %s35
      %p49 = scmp.eq.s32.totalorder %s27, 1
      %p50 = por %p48, %p49
      %p52 = scmp.ne.s32.totalorder %s35, %s51
      %p53 = scmp.eq.s32.totalorder %s27, 0
      %p54 = por %p52, %p53
      %s56 = sadd.s32 %s55, 1
      %p59 = scmp.eq.s32.totalorder %s21, 1
      %p60 = scmp.ne.s32.totalorder %s55, %s57
      %p61 = scmp.eq.s32.totalorder %s21, 0
      %p62 = por %p60, %p61
      %p63 = scmp.ne.s32.totalorder %s55, %s57
      %p64 = scmp.eq.s32.totalorder %s26, 1
      %p65 = por %p63, %p64
      %p66 = scmp.ne.s32.totalorder %s57, %s58
      %p67 = scmp.eq.s32.totalorder %s26, 0
      %p68 = por %p66, %p67
      %p69 = scmp.ne.s32.totalorder %s57, %s58
      %p70 = scmp.eq.s32.totalorder %s27, 1
      %p71 = por %p69, %p70
      %p73 = scmp.ne.s32.totalorder %s58, %s72
      %p74 = scmp.eq.s32.totalorder %s27, 0
      %p75 = por %p73, %p74
      %s77 = sadd.s32 %s76, 1
      %p80 = scmp.eq.s32.totalorder %s21, 1
      %p81 = scmp.ne.s32.totalorder %s76, %s78
      %p82 = scmp.eq.s32.totalorder %s21, 0
      %p83 = por %p81, %p82
      %p84 = scmp.ne.s32.totalorder %s76, %s78
      %p85 = scmp.eq.s32.totalorder %s26, 1
      %p86 = por %p84, %p85
      %p87 = scmp.ne.s32.totalorder %s78, %s79
      %p88 = scmp.eq.s32.totalorder %s26, 0
      %p89 = por %p87, %p88
      %p90 = scmp.ne.s32.totalorder %s78, %s79
      %p91 = scmp.eq.s32.totalorder %s27, 1
      %p92 = por %p90, %p91
      %p94 = scmp.ne.s32.totalorder %s79, %s93
      %p95 = scmp.eq.s32.totalorder %s27, 0
      %p96 = por %p94, %p95
      %s98 = sadd.s32 %s97, 1
      %p101 = scmp.eq.s32.totalorder %s21, 1
      %p102 = scmp.ne.s32.totalorder %s97, %s99
      %p103 = scmp.eq.s32.totalorder %s21, 0
      %p104 = por %p102, %p103
      %p105 = scmp.ne.s32.totalorder %s97, %s99
      %p106 = scmp.eq.s32.totalorder %s26, 1
      %p107 = por %p105, %p106
      %p108 = scmp.ne.s32.totalorder %s99, %s100
      %p109 = scmp.eq.s32.totalorder %s26, 0
      %p110 = por %p108, %p109
      %p111 = scmp.ne.s32.totalorder %s99, %s100
      %p112 = scmp.eq.s32.totalorder %s27, 1
      %p113 = por %p111, %p112
      %p115 = scmp.ne.s32.totalorder %s100, %s114
      %p116 = scmp.eq.s32.totalorder %s27, 0
      %p117 = por %p115, %p116
      %s119 = sadd.s32 %s118, 1
      %p122 = scmp.eq.s32.totalorder %s21, 1
      %p123 = scmp.ne.s32.totalorder %s118, %s120
      %p124 = scmp.eq.s32.totalorder %s21, 0
      %p125 = por %p123, %p124
      %p126 = scmp.ne.s32.totalorder %s118, %s120
      %p127 = scmp.eq.s32.totalorder %s26, 1
      %p128 = por %p126, %p127
      %p129 = scmp.ne.s32.totalorder %s120, %s121
      %p130 = scmp.eq.s32.totalorder %s26, 0
      %p131 = por %p129, %p130
      %p132 = scmp.ne.s32.totalorder %s120, %s121
      %p133 = scmp.eq.s32.totalorder %s27, 1
      %p134 = por %p132, %p133
      %p136 = scmp.ne.s32.totalorder %s121, %s135
      %p137 = scmp.eq.s32.totalorder %s27, 0
      %p138 = por %p136, %p137
      %s140 = sadd.s32 %s139, 1
      %p143 = scmp.eq.s32.totalorder %s21, 1
      %p144 = scmp.ne.s32.totalorder %s139, %s141
      %p145 = scmp.eq.s32.totalorder %s21, 0
      %p146 = por %p144, %p145
      %p147 = scmp.ne.s32.totalorder %s139, %s141
      %p148 = scmp.eq.s32.totalorder %s26, 1
      %p149 = por %p147, %p148
      %p150 = scmp.ne.s32.totalorder %s141, %s142
      %p151 = scmp.eq.s32.totalorder %s26, 0
      %p152 = por %p150, %p151
      %p153 = scmp.ne.s32.totalorder %s141, %s142
      %p154 = scmp.eq.s32.totalorder %s27, 1
      %p155 = por %p153, %p154
      %p157 = scmp.ne.s32.totalorder %s142, %s156
      %p158 = scmp.eq.s32.totalorder %s27, 0
      %p159 = por %p157, %p158
      %s161 = sadd.s32 %s160, 1
      %p164 = scmp.eq.s32.totalorder %s21, 1
      %p165 = scmp.ne.s32.totalorder %s160, %s162
      %p166 = scmp.eq.s32.totalorder %s21, 0
      %p167 = por %p165, %p166
      %p168 = scmp.ne.s32.totalorder %s160, %s162
      %p169 = scmp.eq.s32.totalorder %s26, 1
      %p170 = por %p168, %p169
      %p171 = scmp.ne.s32.totalorder %s162, %s163
      %p172 = scmp.eq.s32.totalorder %s26, 0
      %p173 = por %p171, %p172
      %p174 = scmp.ne.s32.totalorder %s162, %s163
      %p175 = scmp.eq.s32.totalorder %s27, 1
      %p176 = por %p174, %p175
      %p178 = scmp.ne.s32.totalorder %s163, %s177
      %p179 = scmp.eq.s32.totalorder %s27, 0
      %p180 = por %p178, %p179
      %s181 = ssub.s32 %s21, %s28
      %p182 = scmp.eq.s32.totalorder %s181, 0
      %s184 = sadd.s32 %s183, 1
      %s185 = scalar_select %p182, %s183, %s184
      %p188 = pneg %p182
      %p189 = scmp.eq.s32.totalorder %s21, 1
      %p190 = por %p188, %p189
      %p191 = scmp.ne.s32.totalorder %s183, %s186
      %p192 = scmp.eq.s32.totalorder %s21, 0
      %p193 = por %p191, %p192
      %p194 = scmp.ne.s32.totalorder %s183, %s186
      %p195 = scmp.eq.s32.totalorder %s26, 1
      %p196 = por %p194, %p195
      %p197 = scmp.ne.s32.totalorder %s186, %s187
      %p198 = scmp.eq.s32.totalorder %s26, 0
      %p199 = por %p197, %p198
      %p200 = scmp.ne.s32.totalorder %s186, %s187
      %p201 = scmp.eq.s32.totalorder %s27, 1
      %p202 = por %p200, %p201
      %p204 = scmp.ne.s32.totalorder %s187, %s203
      %p205 = scmp.eq.s32.totalorder %s27, 0
      %p206 = por %p204, %p205
      %p207 = scmp.le.s32.totalorder 1, %s21
      %p208 = scmp.lt.s32.totalorder %s21, 3
      %p209 = pnand %p207, %p208
      %p210 = pneg %p209
      // Predicated region
      $region9: #{tpu_custom_call.1} parent=5 // pred_check
        _
      $region10: #{tpu_custom_call.1} parent=5 // pred_check_branch
        %212 = sbr.rel (%p209) target = $region12
      $region11: #{tpu_custom_call.1} parent=5 // pred_region
        %s213 = ssub.s32 %s21, 1
        // Predicated region
        $region13: #{tpu_custom_call.1} parent=11 // pred_check
          %p214 = pneg %p68
        $region14: #{tpu_custom_call.1} parent=11 // pred_check_branch
          %216 = sbr.rel (%p214) target = $region16
        $region15: #{tpu_custom_call.1} parent=11 // pred_region
          %s218 = ssub.s32 512, 512
          %219 = vsyncadd [#allocation6], %s218
          %s220 = sshll.u32 [#allocation5], 4
          %s221 = int_to_ptr.vmem [resolvable:$true] %s220
          %226 = dma.hbm_to_vmem [thread:$0]  %s1, 512, %s221, [#allocation6], 128, 128, 8
        $region16: #{tpu_custom_call.1} parent=11 // pred_fallthru
          _
        // Predicated region
        $region17: #{tpu_custom_call.1} parent=11 // pred_check
          %p227 = pneg %p89
        $region18: #{tpu_custom_call.1} parent=11 // pred_check_branch
          %229 = sbr.rel (%p227) target = $region20
        $region19: #{tpu_custom_call.1} parent=11 // pred_region
          _
        $region20: #{tpu_custom_call.1} parent=11 // pred_fallthru
          _
        // Predicated region
        $region21: #{tpu_custom_call.1} parent=11 // pred_check
          %p230 = pneg %p110
        $region22: #{tpu_custom_call.1} parent=11 // pred_check_branch
          %232 = sbr.rel (%p230) target = $region24
        $region23: #{tpu_custom_call.1} parent=11 // pred_region
          %s234 = ssub.s32 512, 512
          %235 = vsyncadd [#allocation6], %s234
          %s236 = sshll.u32 [#allocation7], 4
          %s237 = int_to_ptr.vmem [resolvable:$true] %s236
          %242 = dma.hbm_to_vmem [thread:$0]  %s3, 512, %s237, [#allocation6], 128, 128, 8
        $region24: #{tpu_custom_call.1} parent=11 // pred_fallthru
          _
        // Predicated region
        $region25: #{tpu_custom_call.1} parent=11 // pred_check
          %p243 = pneg %p131
        $region26: #{tpu_custom_call.1} parent=11 // pred_check_branch
          %245 = sbr.rel (%p243) target = $region28
        $region27: #{tpu_custom_call.1} parent=11 // pred_region
          _
        $region28: #{tpu_custom_call.1} parent=11 // pred_fallthru
          _
        // Predicated region
        $region29: #{tpu_custom_call.1} parent=11 // pred_check
          %p246 = pneg %p152
        $region30: #{tpu_custom_call.1} parent=11 // pred_check_branch
          %248 = sbr.rel (%p246) target = $region32
        $region31: #{tpu_custom_call.1} parent=11 // pred_region
          %s250 = ssub.s32 512, 512
          %251 = vsyncadd [#allocation9], %s250
          %s252 = sshll.u32 [#allocation8], 4
          %s253 = int_to_ptr.vmem [resolvable:$true] %s252
          %258 = dma.hbm_to_vmem [thread:$0]  %s5, 512, %s253, [#allocation9], 128, 128, 8
        $region32: #{tpu_custom_call.1} parent=11 // pred_fallthru
          _
        // Predicated region
        $region33: #{tpu_custom_call.1} parent=11 // pred_check
          %p259 = pneg %p173
        $region34: #{tpu_custom_call.1} parent=11 // pred_check_branch
          %261 = sbr.rel (%p259) target = $region36
        $region35: #{tpu_custom_call.1} parent=11 // pred_region
          _
        $region36: #{tpu_custom_call.1} parent=11 // pred_fallthru
          _
      $region12: #{tpu_custom_call.1} parent=5 // pred_fallthru
        _
      %p262 = scmp.lt.s32.totalorder %s21, 2
      // Predicated region
      $region37: #{tpu_custom_call.1} parent=5 // pred_check
        %p263 = pneg %p262
      $region38: #{tpu_custom_call.1} parent=5 // pred_check_branch
        %265 = sbr.rel (%p263) target = $region40
      $region39: #{tpu_custom_call.1} parent=5 // pred_region
        // Predicated region
        $region41: #{tpu_custom_call.1} parent=39 // pred_check
          %p266 = pneg %p41
        $region42: #{tpu_custom_call.1} parent=39 // pred_check_branch
          %268 = sbr.rel (%p266) target = $region44
        $region43: #{tpu_custom_call.1} parent=39 // pred_region
          %s269 = sand.u32 %s31, 1
          %s270 = scalar_lea.sflag [#allocation3], %s269
          %s271 = sand.u32 %s31, 1
          %s272 = smul.addr %s271, 8
          %s273 = scalar_lea.vmem [#allocation2], %s272
          %s275 = ssub.s32 128, 128
          %276 = vsyncadd %s270, %s275
          %s277 = smul.addr %s21, 128
          %s278 = scalar_lea.hbm %s0, %s277
          %s280 = sshll.u32 %s273, 4
          %s281 = int_to_ptr.vmem [resolvable:$true] %s280
          %283 = dma.hbm_to_vmem [thread:$0]  %s278, 128, %s281, %s270
        $region44: #{tpu_custom_call.1} parent=39 // pred_fallthru
          _
      $region40: #{tpu_custom_call.1} parent=5 // pred_fallthru
        _
      %p284 = scmp.le.s32.totalorder 1, %s21
      %p285 = scmp.lt.s32.totalorder %s21, 3
      %p286 = pnand %p284, %p285
      %p287 = pneg %p286
      // Predicated region
      $region45: #{tpu_custom_call.1} parent=5 // pred_check
        _
      $region46: #{tpu_custom_call.1} parent=5 // pred_check_branch
        %289 = sbr.rel (%p286) target = $region48
      $region47: #{tpu_custom_call.1} parent=5 // pred_region
        %s290 = ssub.s32 %s21, 1
        %s291 = sand.u32 %s34, 1
        %s292 = scalar_lea.sflag [#allocation3], %s291
        %s293 = sand.u32 %s34, 1
        %s294 = smul.addr %s293, 8
        %s295 = scalar_lea.vmem [#allocation2], %s294
        // Predicated region
        $region49: #{tpu_custom_call.1} parent=47 // pred_check
          %p296 = pneg %p47
        $region50: #{tpu_custom_call.1} parent=47 // pred_check_branch
          %298 = sbr.rel (%p296) target = $region52
        $region51: #{tpu_custom_call.1} parent=47 // pred_region
          %299 = dma.done %s292, 128
        $region52: #{tpu_custom_call.1} parent=47 // pred_fallthru
          _
        // Predicated region
        $region53: #{tpu_custom_call.1} parent=47 // pred_check
          %p300 = pneg %p68
        $region54: #{tpu_custom_call.1} parent=47 // pred_check_branch
          %302 = sbr.rel (%p300) target = $region56
        $region55: #{tpu_custom_call.1} parent=47 // pred_region
          %303 = dma.done [#allocation6], 512
        $region56: #{tpu_custom_call.1} parent=47 // pred_fallthru
          _
        // Predicated region
        $region57: #{tpu_custom_call.1} parent=47 // pred_check
          %p304 = pneg %p110
        $region58: #{tpu_custom_call.1} parent=47 // pred_check_branch
          %306 = sbr.rel (%p304) target = $region60
        $region59: #{tpu_custom_call.1} parent=47 // pred_region
          %307 = dma.done [#allocation6], 512
        $region60: #{tpu_custom_call.1} parent=47 // pred_fallthru
          _
        // Predicated region
        $region61: #{tpu_custom_call.1} parent=47 // pred_check
          %p308 = pneg %p152
        $region62: #{tpu_custom_call.1} parent=47 // pred_check_branch
          %310 = sbr.rel (%p308) target = $region64
        $region63: #{tpu_custom_call.1} parent=47 // pred_region
          %311 = dma.done [#allocation9], 512
        $region64: #{tpu_custom_call.1} parent=47 // pred_fallthru
          _
        %s312 = sand.u32 %s34, 1
        %s313 = scalar_lea.sflag [#allocation3], %s312
        %s314 = sand.u32 %s34, 1
        %s315 = smul.addr %s314, 8
        %s316 = scalar_lea.vmem [#allocation2], %s315
        %p317 = pneg %p47
        %p318 = pneg %p44
        %p319 = pneg %p68
        %p320 = pneg %p65
        %p321 = pneg %p89
        %p322 = pneg %p86
        %p323 = pneg %p110
        %p324 = pneg %p107
        %p325 = pneg %p131
        %p326 = pneg %p128
        %p327 = pneg %p152
        %p328 = pneg %p149
        %p329 = pneg %p173
        %p330 = pneg %p170
        %p331 = pneg %p199
        %p332 = pneg %p196
        %s333 = sand.u32 %s186, 1
        %s334 = scalar_lea.sflag [#allocation4], %s333
        %s335 = sand.u32 %s186, 1
        %s336 = smul.addr %s335, 8
        %s337 = scalar_lea.vmem [#allocation10], %s336
        %v338 = vld [vmem:[%s295] sm:$0xff]
        %v339 = vld [vmem:[#allocation5] sm:$0xff]
        %v340 = vld [vmem:[#allocation5 + $0x8] sm:$0xff]
        %v341 = vld [vmem:[#allocation5 + $0x10] sm:$0xff]
        %v342 = vld [vmem:[#allocation5 + $0x18] sm:$0xff]
        %v343 = vld [vmem:[%s2] sm:$0x1]
        %v345 = vlaneseq
        %v346 = vshrl.u32 %v345, 7
        %v347 = vsub.s32 0, %v346
        %v348 = vrot.slane %v343, %v347
        %vm350 = vcmask 261120
        %v352 = vsel %vm350, %v338, 0
        %354 = vmatprep.subr.mxu0 0.0
        %355 = vmatpush1.msra.mxu0 %v339
        %356 = vmatprep.subr.mxu0 0.0
        %357 = vmatpush1.msra.mxu0 %v340
        %358 = vmatprep.subr.mxu0 0.0
        %359 = vmatpush1.msra.mxu0 %v341
        %360 = vmatprep.subr.mxu0 0.0
        %361 = vmatpush1.msra.mxu0 %v342
        %362 = vmatprep.subr.mxu0 0.0
        %363 = vmatpush1.msra.mxu0 0.0
        %364 = vmatprep.subr.mxu0 0.0
        %365 = vmatpush1.msra.mxu0 0.0
        %366 = vmatprep.subr.mxu0 0.0
        %367 = vmatpush1.msra.mxu0 0.0
        %368 = vmatprep.subr.mxu0 0.0
        %369 = vmatpush1.msra.mxu0 0.0
        %370 = vmatprep.subr.mxu0 0.0
        %371 = vmatpush1.msra.mxu0 0.0
        %372 = vmatprep.subr.mxu0 0.0
        %373 = vmatpush1.msra.mxu0 0.0
        %374 = vmatprep.subr.mxu0 0.0
        %375 = vmatpush1.msra.mxu0 0.0
        %376 = vmatprep.subr.mxu0 0.0
        %377 = vmatpush1.msra.mxu0 0.0
        %378 = vmatprep.subr.mxu0 0.0
        %379 = vmatpush1.msra.mxu0 0.0
        %380 = vmatprep.subr.mxu0 0.0
        %381 = vmatpush1.msra.mxu0 0.0
        %382 = vmatprep.subr.mxu0 0.0
        %383 = vmatpush1.msra.mxu0 0.0
        %384 = vmatprep.subr.mxu0 0.0
        %385 = vmatpush1.msra.mxu0 0.0
        %386 = vmatprep.subr.mxu0 0.0
        %387 = vmatpush1.msra.mxu0 0.0
        %388 = vmatprep.subr.mxu0 0.0
        %389 = vmatpush1.msra.mxu0 0.0
        %390 = vmatprep.subr.mxu0 0.0
        %391 = vmatpush1.msra.mxu0 0.0
        %392 = vmatprep.subr.mxu0 0.0
        %393 = vmatpush1.msra.mxu0 0.0
        %394 = vmatprep.subr.mxu0 0.0
        %395 = vmatpush1.msra.mxu0 0.0
        %396 = vmatprep.subr.mxu0 0.0
        %397 = vmatpush1.msra.mxu0 0.0
        %398 = vmatprep.subr.mxu0 0.0
        %399 = vmatpush1.msra.mxu0 0.0
        %400 = vmatprep.subr.mxu0 0.0
        %401 = vmatpush1.msra.mxu0 0.0
        %402 = vmatprep.subr.mxu0 0.0
        %403 = vmatpush1.msra.mxu0 0.0
        %404 = vmatprep.subr.mxu0 0.0
        %405 = vmatpush1.msra.mxu0 0.0
        %406 = vmatprep.subr.mxu0 0.0
        %407 = vmatpush1.msra.mxu0 0.0
        %408 = vmatprep.subr.mxu0 0.0
        %409 = vmatpush1.msra.mxu0 0.0
        %410 = vmatprep.subr.mxu0 0.0
        %411 = vmatpush1.msra.mxu0 0.0
        %412 = vmatprep.subr.mxu0 0.0
        %413 = vmatpush1.msra.mxu0 0.0
        %414 = vmatprep.subr.mxu0 0.0
        %415 = vmatpush1.msra.mxu0 0.0
        %416 = vmatprep.subr.mxu0 0.0
        %417 = vmatpush1.msra.mxu0 0.0
        %418 = vmatprep.mubr.f32.mxu0 0.0
        %419 = vmatmul.mubr.f32.gmra.mrb[0].mxu0 %v352
        %v420 = vpop.f32.mrb[0].mxu0
        %v421 = vadd.f32 %v348, %v420
        %v422 = vpop.f32.mrb[0].mxu0
        %423 = vdwg.mxu0
        %v424 = vmax.f32 %v421, 0.0
        %v425 = vld [vmem:[#allocation7] sm:$0xff]
        %v426 = vld [vmem:[#allocation7 + $0x8] sm:$0xff]
        %v427 = vld [vmem:[#allocation7 + $0x10] sm:$0xff]
        %v428 = vld [vmem:[#allocation7 + $0x18] sm:$0xff]
        %v429 = vld [vmem:[%s4] sm:$0x1]
        %v431 = vlaneseq
        %v432 = vshrl.u32 %v431, 7
        %v433 = vsub.s32 0, %v432
        %v434 = vrot.slane %v429, %v433
        %v437 = vsel %vm350, %v424, 0
        %439 = vmatprep.subr.mxu0 0.0
        %440 = vmatpush1.msra.mxu0 %v425
        %441 = vmatprep.subr.mxu0 0.0
        %442 = vmatpush1.msra.mxu0 %v426
        %443 = vmatprep.subr.mxu0 0.0
        %444 = vmatpush1.msra.mxu0 %v427
        %445 = vmatprep.subr.mxu0 0.0
        %446 = vmatpush1.msra.mxu0 %v428
        %447 = vmatprep.subr.mxu0 0.0
        %448 = vmatpush1.msra.mxu0 0.0
        %449 = vmatprep.subr.mxu0 0.0
        %450 = vmatpush1.msra.mxu0 0.0
        %451 = vmatprep.subr.mxu0 0.0
        %452 = vmatpush1.msra.mxu0 0.0
        %453 = vmatprep.subr.mxu0 0.0
        %454 = vmatpush1.msra.mxu0 0.0
        %455 = vmatprep.subr.mxu0 0.0
        %456 = vmatpush1.msra.mxu0 0.0
        %457 = vmatprep.subr.mxu0 0.0
        %458 = vmatpush1.msra.mxu0 0.0
        %459 = vmatprep.subr.mxu0 0.0
        %460 = vmatpush1.msra.mxu0 0.0
        %461 = vmatprep.subr.mxu0 0.0
        %462 = vmatpush1.msra.mxu0 0.0
        %463 = vmatprep.subr.mxu0 0.0
        %464 = vmatpush1.msra.mxu0 0.0
        %465 = vmatprep.subr.mxu0 0.0
        %466 = vmatpush1.msra.mxu0 0.0
        %467 = vmatprep.subr.mxu0 0.0
        %468 = vmatpush1.msra.mxu0 0.0
        %469 = vmatprep.subr.mxu0 0.0
        %470 = vmatpush1.msra.mxu0 0.0
        %471 = vmatprep.subr.mxu0 0.0
        %472 = vmatpush1.msra.mxu0 0.0
        %473 = vmatprep.subr.mxu0 0.0
        %474 = vmatpush1.msra.mxu0 0.0
        %475 = vmatprep.subr.mxu0 0.0
        %476 = vmatpush1.msra.mxu0 0.0
        %477 = vmatprep.subr.mxu0 0.0
        %478 = vmatpush1.msra.mxu0 0.0
        %479 = vmatprep.subr.mxu0 0.0
        %480 = vmatpush1.msra.mxu0 0.0
        %481 = vmatprep.subr.mxu0 0.0
        %482 = vmatpush1.msra.mxu0 0.0
        %483 = vmatprep.subr.mxu0 0.0
        %484 = vmatpush1.msra.mxu0 0.0
        %485 = vmatprep.subr.mxu0 0.0
        %486 = vmatpush1.msra.mxu0 0.0
        %487 = vmatprep.subr.mxu0 0.0
        %488 = vmatpush1.msra.mxu0 0.0
        %489 = vmatprep.subr.mxu0 0.0
        %490 = vmatpush1.msra.mxu0 0.0
        %491 = vmatprep.subr.mxu0 0.0
        %492 = vmatpush1.msra.mxu0 0.0
        %493 = vmatprep.subr.mxu0 0.0
        %494 = vmatpush1.msra.mxu0 0.0
        %495 = vmatprep.subr.mxu0 0.0
        %496 = vmatpush1.msra.mxu0 0.0
        %497 = vmatprep.subr.mxu0 0.0
        %498 = vmatpush1.msra.mxu0 0.0
        %499 = vmatprep.subr.mxu0 0.0
        %500 = vmatpush1.msra.mxu0 0.0
        %501 = vmatprep.subr.mxu0 0.0
        %502 = vmatpush1.msra.mxu0 0.0
        %503 = vmatprep.mubr.f32.mxu0 0.0
        %504 = vmatmul.mubr.f32.gmra.mrb[0].mxu0 %v437
        %v505 = vpop.f32.mrb[0].mxu0
        %v506 = vadd.f32 %v434, %v505
        %v507 = vpop.f32.mrb[0].mxu0
        %508 = vdwg.mxu0
        %v509 = vmax.f32 %v506, 0.0
        %v510 = vld [vmem:[#allocation8] sm:$0xff]
        %v511 = vld [vmem:[#allocation8 + $0x8] sm:$0xff]
        %v512 = vld [vmem:[#allocation8 + $0x10] sm:$0xff]
        %v513 = vld [vmem:[#allocation8 + $0x18] sm:$0xff]
        %v514 = vld [vmem:[%s6] sm:$0x1]
        %v516 = vlaneseq
        %v517 = vshrl.u32 %v516, 7
        %v518 = vsub.s32 0, %v517
        %v519 = vrot.slane %v514, %v518
        %v522 = vsel %vm350, %v509, 0
        %524 = vmatprep.subr.mxu0 0.0
        %525 = vmatpush1.msra.mxu0 %v510
        %526 = vmatprep.subr.mxu0 0.0
        %527 = vmatpush1.msra.mxu0 %v511
        %528 = vmatprep.subr.mxu0 0.0
        %529 = vmatpush1.msra.mxu0 %v512
        %530 = vmatprep.subr.mxu0 0.0
        %531 = vmatpush1.msra.mxu0 %v513
        %532 = vmatprep.subr.mxu0 0.0
        %533 = vmatpush1.msra.mxu0 0.0
        %534 = vmatprep.subr.mxu0 0.0
        %535 = vmatpush1.msra.mxu0 0.0
        %536 = vmatprep.subr.mxu0 0.0
        %537 = vmatpush1.msra.mxu0 0.0
        %538 = vmatprep.subr.mxu0 0.0
        %539 = vmatpush1.msra.mxu0 0.0
        %540 = vmatprep.subr.mxu0 0.0
        %541 = vmatpush1.msra.mxu0 0.0
        %542 = vmatprep.subr.mxu0 0.0
        %543 = vmatpush1.msra.mxu0 0.0
        %544 = vmatprep.subr.mxu0 0.0
        %545 = vmatpush1.msra.mxu0 0.0
        %546 = vmatprep.subr.mxu0 0.0
        %547 = vmatpush1.msra.mxu0 0.0
        %548 = vmatprep.subr.mxu0 0.0
        %549 = vmatpush1.msra.mxu0 0.0
        %550 = vmatprep.subr.mxu0 0.0
        %551 = vmatpush1.msra.mxu0 0.0
        %552 = vmatprep.subr.mxu0 0.0
        %553 = vmatpush1.msra.mxu0 0.0
        %554 = vmatprep.subr.mxu0 0.0
        %555 = vmatpush1.msra.mxu0 0.0
        %556 = vmatprep.subr.mxu0 0.0
        %557 = vmatpush1.msra.mxu0 0.0
        %558 = vmatprep.subr.mxu0 0.0
        %559 = vmatpush1.msra.mxu0 0.0
        %560 = vmatprep.subr.mxu0 0.0
        %561 = vmatpush1.msra.mxu0 0.0
        %562 = vmatprep.subr.mxu0 0.0
        %563 = vmatpush1.msra.mxu0 0.0
        %564 = vmatprep.subr.mxu0 0.0
        %565 = vmatpush1.msra.mxu0 0.0
        %566 = vmatprep.subr.mxu0 0.0
        %567 = vmatpush1.msra.mxu0 0.0
        %568 = vmatprep.subr.mxu0 0.0
        %569 = vmatpush1.msra.mxu0 0.0
        %570 = vmatprep.subr.mxu0 0.0
        %571 = vmatpush1.msra.mxu0 0.0
        %572 = vmatprep.subr.mxu0 0.0
        %573 = vmatpush1.msra.mxu0 0.0
        %574 = vmatprep.subr.mxu0 0.0
        %575 = vmatpush1.msra.mxu0 0.0
        %576 = vmatprep.subr.mxu0 0.0
        %577 = vmatpush1.msra.mxu0 0.0
        %578 = vmatprep.subr.mxu0 0.0
        %579 = vmatpush1.msra.mxu0 0.0
        %580 = vmatprep.subr.mxu0 0.0
        %581 = vmatpush1.msra.mxu0 0.0
        %582 = vmatprep.subr.mxu0 0.0
        %583 = vmatpush1.msra.mxu0 0.0
        %584 = vmatprep.subr.mxu0 0.0
        %585 = vmatpush1.msra.mxu0 0.0
        %586 = vmatprep.subr.mxu0 0.0
        %587 = vmatpush1.msra.mxu0 0.0
        %588 = vmatprep.mubr.f32.mxu0 0.0
        %589 = vmatmul.mubr.f32.gmra.mrb[0].mxu0 %v522
        %v590 = vpop.f32.mrb[0].mxu0
        %v591 = vadd.f32 %v519, %v590
        %v592 = vpop.f32.mrb[0].mxu0
        %593 = vdwg.mxu0
        %594 = vst [vmem:[%s337] sm:$0xff] %v591
        %s595 = sand.u32 %s186, 1
        %s596 = scalar_lea.sflag [#allocation4], %s595
        %s597 = sand.u32 %s186, 1
        %s598 = smul.addr %s597, 8
        %s599 = scalar_lea.vmem [#allocation10], %s598
        // Predicated region
        $region65: #{tpu_custom_call.1} parent=47 // pred_check
          %p600 = pneg %p196
        $region66: #{tpu_custom_call.1} parent=47 // pred_check_branch
          %602 = sbr.rel (%p600) target = $region68
        $region67: #{tpu_custom_call.1} parent=47 // pred_region
          %s604 = ssub.s32 128, 128
          %605 = vsyncadd %s596, %s604
          %s606 = smul.addr %s26, 128
          %s607 = scalar_lea.hbm %s7, %s606
          %s609 = sshll.u32 %s599, 4
          %s610 = int_to_ptr.vmem [resolvable:$true] %s609
          %612 = dma.vmem_to_hbm [thread:$0]  %s610, 128, %s607, %s596
        $region68: #{tpu_custom_call.1} parent=47 // pred_fallthru
          _
      $region48: #{tpu_custom_call.1} parent=5 // pred_fallthru
        _
      %p613 = scmp.le.s32.totalorder 2, %s21
      // Predicated region
      $region69: #{tpu_custom_call.1} parent=5 // pred_check
        %p614 = pneg %p613
      $region70: #{tpu_custom_call.1} parent=5 // pred_check_branch
        %616 = sbr.rel (%p614) target = $region72
      $region71: #{tpu_custom_call.1} parent=5 // pred_region
        %s617 = ssub.s32 %s21, 2
        // Predicated region
        $region73: #{tpu_custom_call.1} parent=71 // pred_check
          %p618 = pneg %p202
        $region74: #{tpu_custom_call.1} parent=71 // pred_check_branch
          %620 = sbr.rel (%p618) target = $region76
        $region75: #{tpu_custom_call.1} parent=71 // pred_region
          %s621 = sand.u32 %s187, 1
          %s622 = scalar_lea.sflag [#allocation4], %s621
          %s623 = sand.u32 %s187, 1
          %s624 = smul.addr %s623, 8
          %s625 = scalar_lea.vmem [#allocation10], %s624
          %626 = dma.done %s622, 128
        $region76: #{tpu_custom_call.1} parent=71 // pred_fallthru
          _
      $region72: #{tpu_custom_call.1} parent=5 // pred_fallthru
        _
    $region6: #{tpu_custom_call.1} parent=1 // loop_footer
      %s25 = sadd.s32 1, %s21
    $region7: #{tpu_custom_call.1} parent=1 // loop_footer_branch
      %20 = sbr.rel target = $region3
    $region8: #{tpu_custom_call.1} parent=1 // loop_exit
      _
    %627 = vsyncpa [#allocation3], 1
    %s628 = scalar_lea.sflag [#allocation3], 1
    %629 = vsyncpa %s628, 1
    %630 = vsyncpa [#allocation6], 1
    %631 = vsyncpa [#allocation9], 1
    %632 = vsyncpa [#allocation4], 1
    %s633 = scalar_lea.sflag [#allocation4], 1
    %634 = vsyncpa %s633, 1

</llo_original>
